<compile_context>
chip_gen: v5e
topology: v5e:2x2
jax: 0.10.0
libtpu: 0.0.40
codegen_flags: <defaults>
</compile_context>

<pallas_src>
import functools
import math

import jax
import jax.numpy as jnp
from jax.experimental import pallas as pl
from jax.experimental.pallas import tpu as pltpu


def stack_kernel(x0_ref, q_ref, wq_ref, wkv_ref, wfc_ref, bias_ref,
                 o_ref, carry_ref, *, num_heads, d_head, hw_valid):
    """All layers for one batch element, channel-major (C, HWp) layout.

    Grid = (batch, layer); layer is the inner ("arbitrary") axis.

    Refs:
      x0_ref   : (C, HWp)  initial key/value input (NCHW-native), bf16
      q_ref    : (C, HWp)  query input (shared across layers),    bf16
      wq_ref   : (C, C)    Wq  (out, in), bf16
      wkv_ref  : (2C, C)   [Wk/sqrt(d); Wv] stacked (out, in), bf16
      wfc_ref  : (C, C)    Wfc cols permuted to head-major and scaled by gamma, bf16
      bias_ref : (C, 1)    Wfc @ beta, f32
      o_ref    : (C, HWp)  final output (written at last layer), f32
      carry_ref: (C, HWp)  inter-layer activation carry, bf16 scratch
    """
    layer = pl.program_id(1)
    n_layers = pl.num_programs(1)
    m, d = num_heads, d_head
    C, HWp = o_ref.shape
    f32, bf16 = jnp.float32, jnp.bfloat16

    @pl.when(layer == 0)
    def _():
        carry_ref[...] = x0_ref[...]

    xkv = carry_ref[...]                 # (C, HWp) bf16   key/value input
    xq = q_ref[...]                      # (C, HWp) bf16   query input

    # Projections, channel-major: p^T = W @ x^T.  K|V fused into one matmul;
    # the 1/sqrt(d) scale is pre-folded into the Wk rows.
    qpT = jnp.dot(wq_ref[...], xq, preferred_element_type=f32)      # (C, HWp)
    kvpT = jnp.dot(wkv_ref[...], xkv, preferred_element_type=f32)   # (2C, HWp)

    # Heads as a batched leading axis via sublane-split reshapes.
    qT3 = qpT.reshape(m, d, HWp).astype(bf16)                        # (m, d, HWp)
    kT3 = kvpT[:C].reshape(m, d, HWp).astype(bf16)
    vT3 = kvpT[C:].reshape(m, d, HWp).astype(bf16)

    # Scores with transposed-LHS contraction (no Q relayout): (m, HWq, HWk).
    s = jnp.einsum('hdq,hdk->hqk', qT3, kT3, preferred_element_type=f32)
    if hw_valid < HWp:
        col = jax.lax.broadcasted_iota(jnp.int32, (1, 1, HWp), 2)
        s = jnp.where(col < hw_valid, s, -1e30)   # mask pad key positions
    s = s - jnp.max(s, axis=-1, keepdims=True)
    e = jnp.exp(s)
    p = e * pl.reciprocal(jnp.sum(e, axis=-1, keepdims=True), approx=True)

    # PV directly in channel-major order: (m, d, HWq) -> (C, HWp).
    oT3 = jnp.einsum('hdk,hqk->hdq', vT3, p.astype(bf16),
                     preferred_element_type=f32)
    attnT = oT3.reshape(C, HWp)

    # Residual (query projection) + LayerNorm over channels (sublane axis).
    # gamma/beta are folded into wfc / bias.
    y = attnT + qpT
    mu = jnp.mean(y, axis=0, keepdims=True)
    yc = y - mu
    var = jnp.mean(yc * yc, axis=0, keepdims=True)
    norm = yc * jax.lax.rsqrt(var + 1e-6)

    out = jnp.dot(wfc_ref[...], norm.astype(bf16),
                  preferred_element_type=f32) + bias_ref[...]        # (C, HWp)

    carry_ref[...] = out.astype(bf16)

    @pl.when(layer == n_layers - 1)
    def _():
        o_ref[...] = out


def component_attention_forward(inp_nchw, q_cb_nchw, layer_params, num_heads):
    """ComponentAttentionModule: input = layer(key=input, value=input, query=q_cb)."""
    B, C, H, W = inp_nchw.shape
    assert C % num_heads == 0
    m = num_heads
    d = C // m
    HW = H * W
    HWp = ((HW + 127) // 128) * 128        # lane-dense last dim
    n_layers = len(layer_params)

    x = inp_nchw.reshape(B, C, HW)
    q = q_cb_nchw.reshape(B, C, HW)
    if HWp != HW:
        pad = ((0, 0), (0, 0), (0, HWp - HW))
        x = jnp.pad(x, pad)
        q = jnp.pad(q, pad)
    x = x.astype(jnp.bfloat16)             # bf16 activations (matmul operands)
    q = q.astype(jnp.bfloat16)

    # Absorb the einops '(c m)' interleave + LayerNorm affine + score scale
    # into the weights (wrapper side, constant-folded by XLA).
    idx = jnp.arange(C)
    perm = (idx % d) * m + (idx // d)      # head-major channel -> interleaved channel
    scale = 1.0 / math.sqrt(d)

    wq_l, wkv_l, wfc_l, bias_l = [], [], [], []
    for (Wq, Wk, Wv, Wfc, gamma, beta) in layer_params:
        wq_l.append(Wq.astype(jnp.bfloat16))                               # (C, C)
        wkv_l.append(jnp.concatenate([Wk * scale, Wv], 0).astype(jnp.bfloat16))  # (2C, C)
        wfc_l.append((Wfc[:, perm] * gamma[perm][None, :]).astype(jnp.bfloat16))  # (C, C)
        bias_l.append((Wfc @ beta).reshape(C, 1).astype(jnp.float32))      # (C, 1)
    wq_s = jnp.stack(wq_l)      # (L, C, C)
    wkv_s = jnp.stack(wkv_l)    # (L, 2C, C)
    wfc_s = jnp.stack(wfc_l)    # (L, C, C)
    bias_s = jnp.stack(bias_l)  # (L, C, 1)

    # VMEM requirement estimate (bytes) with headroom; floor 32 MiB, cap 48 MiB
    # so v7x (64 MiB physical per TC) keeps compiler scratch headroom.
    est = (2 * (4 * C * C * 2)          # wq + wkv + wfc blocks, double-buffered, bf16
           + 2 * (C * 128 * 4)          # bias block (lane-padded), double-buffered
           + 2 * 2 * (C * HWp * 2)      # x0 + q input blocks, double-buffered, bf16
           + 2 * (C * HWp * 4)          # output block, double-buffered, f32
           + C * HWp * 2                # carry scratch
           + 12 * C * HWp * 4           # per-layer activation temporaries
           + 3 * m * HWp * HWp * 4)     # scores / exp / probs
    vmem_limit = min(max(2 * est, 32 * 1024 * 1024), 48 * 1024 * 1024)

    kernel = functools.partial(stack_kernel, num_heads=m, d_head=d, hw_valid=HW)
    act_spec = pl.BlockSpec((None, C, HWp), lambda b, l: (b, 0, 0))

    out = pl.pallas_call(
        kernel,
        out_shape=jax.ShapeDtypeStruct((B, C, HWp), jnp.float32),
        grid=(B, n_layers),
        in_specs=[act_spec,                                          # x0
                  act_spec,                                          # q_cb
                  pl.BlockSpec((None, C, C), lambda b, l: (l, 0, 0)),      # Wq
                  pl.BlockSpec((None, 2 * C, C), lambda b, l: (l, 0, 0)),  # [Wk;Wv]
                  pl.BlockSpec((None, C, C), lambda b, l: (l, 0, 0)),      # Wfc*gamma
                  pl.BlockSpec((None, C, 1), lambda b, l: (l, 0, 0))],     # Wfc@beta
        out_specs=act_spec,
        scratch_shapes=[pltpu.VMEM((C, HWp), jnp.bfloat16)],         # layer carry
        compiler_params=pltpu.CompilerParams(
            dimension_semantics=("parallel", "arbitrary"),
            vmem_limit_bytes=vmem_limit),
    )(x, q, wq_s, wkv_s, wfc_s, bias_s)

    if HWp != HW:
        out = out[:, :, :HW]
    return out.reshape(B, C, H, W)


# ----------------------------- pure-JAX reference -----------------------------

def mha_reference(key_nchw, value_nchw, query_nchw,
                  Wq, Wk, Wv, Wfc, gamma, beta, num_heads):
    B, C, H, W = query_nchw.shape
    d = C // num_heads
    HW = H * W
    to_seq = lambda x: jnp.transpose(x.reshape(B, C, HW), (0, 2, 1))
    q, k, v = to_seq(query_nchw), to_seq(key_nchw), to_seq(value_nchw)
    qm, km, vm = q @ Wq.T, k @ Wk.T, v @ Wv.T

    def rt(x):  # 'b hw (m d) -> (b m) hw d'
        x = x.reshape(B, HW, num_heads, d)
        return jnp.transpose(x, (0, 2, 1, 3)).reshape(B * num_heads, HW, d)

    Qh, Kh, Vh = rt(qm), rt(km), rt(vm)
    scores = Qh @ jnp.transpose(Kh, (0, 2, 1)) / math.sqrt(d)
    p = jax.nn.softmax(scores, axis=-1)
    out = p @ Vh

    def interleave(x):  # '(b m) hw c -> b hw (c m)'
        x = x.reshape(B, num_heads, HW, d)
        return jnp.transpose(x, (0, 2, 3, 1)).reshape(B, HW, d * num_heads)

    y = interleave(out) + interleave(Qh)
    mu = jnp.mean(y, axis=-1, keepdims=True)
    var = jnp.mean((y - mu) ** 2, axis=-1, keepdims=True)
    ln = (y - mu) / jnp.sqrt(var + 1e-6) * gamma + beta
    o = ln @ Wfc.T
    return jnp.transpose(o, (0, 2, 1)).reshape(B, C, H, W)


def component_attention_reference(inp, q_cb, layer_params, num_heads):
    x = inp
    for (Wq, Wk, Wv, Wfc, gamma, beta) in layer_params:
        x = mha_reference(x, x, q_cb, Wq, Wk, Wv, Wfc, gamma, beta, num_heads)
    return x


if __name__ == "__main__":
    B, num_heads, C, H, W = 2, 4, 32, 8, 8
    num_layers = 2

    key = jax.random.PRNGKey(0)
    k_in, k_q, k_w = jax.random.split(key, 3)
    inp = jax.random.normal(k_in, (B, C, H, W), jnp.float32)
    q_cb = jax.random.normal(k_q, (B, C, H, W), jnp.float32)

    wscale = 1.0 / math.sqrt(C)
    layer_params = []
    for wkey in jax.random.split(k_w, num_layers):
        ks = jax.random.split(wkey, 6)
        Wq = jax.random.normal(ks[0], (C, C), jnp.float32) * wscale
        Wk = jax.random.normal(ks[1], (C, C), jnp.float32) * wscale
        Wv = jax.random.normal(ks[2], (C, C), jnp.float32) * wscale
        Wfc = jax.random.normal(ks[3], (C, C), jnp.float32) * wscale
        gamma = 1.0 + 0.1 * jax.random.normal(ks[4], (C,), jnp.float32)
        beta = 0.1 * jax.random.normal(ks[5], (C,), jnp.float32)
        layer_params.append((Wq, Wk, Wv, Wfc, gamma, beta))

    fwd = jax.jit(functools.partial(component_attention_forward,
                                    num_heads=num_heads))
    out = jax.block_until_ready(fwd(inp, q_cb, layer_params))

    ref = component_attention_reference(inp, q_cb, layer_params, num_heads)
    assert out.shape == (B, C, H, W)
    err = jnp.max(jnp.abs(out - ref))
    # bf16 MXU operands + bf16 inter-layer carry + approx softmax reciprocal
    # (f32 accumulation / softmax / LayerNorm) vs. the all-f32 reference.
    assert jnp.allclose(out, ref, atol=1e-1, rtol=1e-1), f"max abs err {err}"
    print("KERNEL_OK")
</pallas_src>

<mosaic_0001>
module attributes {stable_mosaic.version = 11 : i64} {
  func.func @stack_kernel(%arg0: i32, %arg1: i32, %arg2: memref<1x32x128xbf16, #tpu.memory_space<vmem>>, %arg3: memref<1x32x128xbf16, #tpu.memory_space<vmem>>, %arg4: memref<1x32x32xbf16, #tpu.memory_space<vmem>>, %arg5: memref<1x64x32xbf16, #tpu.memory_space<vmem>>, %arg6: memref<1x32x32xbf16, #tpu.memory_space<vmem>>, %arg7: memref<1x32x1xf32, #tpu.memory_space<vmem>>, %arg8: memref<1x32x128xf32, #tpu.memory_space<vmem>>, %arg9: memref<32x128xbf16, #tpu.memory_space<vmem>>) attributes {dimension_semantics = [#tpu.dimension_semantics<parallel>, #tpu.dimension_semantics<arbitrary>], iteration_bounds = array<i64: 2, 2>, scalar_prefetch = 0 : i64, scratch_operands = 1 : i64, tpu.core_type = #tpu.core_type<tc>, window_params = [{transform_indices = @transform_0, window_bounds = array<i64: 1, 32, 128>}, {transform_indices = @transform_1, window_bounds = array<i64: 1, 32, 128>}, {transform_indices = @transform_2, window_bounds = array<i64: 1, 32, 32>}, {transform_indices = @transform_3, window_bounds = array<i64: 1, 64, 32>}, {transform_indices = @transform_4, window_bounds = array<i64: 1, 32, 32>}, {transform_indices = @transform_5, window_bounds = array<i64: 1, 32, 1>}, {transform_indices = @transform_6, window_bounds = array<i64: 1, 32, 128>}]} {
    %c0_i32 = arith.constant 0 : i32
    %0 = arith.cmpi eq, %arg1, %c0_i32 : i32
    %1 = arith.extui %0 : i1 to i32
    %c0_i32_0 = arith.constant 0 : i32
    %2 = arith.cmpi ne, %1, %c0_i32_0 : i32
    scf.if %2 {
      %c0_32 = arith.constant 0 : index
      %c0_33 = arith.constant 0 : index
      %c0_34 = arith.constant 0 : index
      %71 = vector.load %arg2[%c0_32, %c0_33, %c0_34] : memref<1x32x128xbf16, #tpu.memory_space<vmem>>, vector<1x32x128xbf16>
      %72 = vector.shape_cast %71 : vector<1x32x128xbf16> to vector<32x128xbf16>
      %c0_35 = arith.constant 0 : index
      %c0_36 = arith.constant 0 : index
      %73 = vector.load %arg9[%c0_35, %c0_36] : memref<32x128xbf16, #tpu.memory_space<vmem>>, vector<32x128xbf16>
      tpu.vector_store %arg9[%c0_35, %c0_36], %72 {strides = array<i32>} : memref<32x128xbf16, #tpu.memory_space<vmem>>, vector<32x128xbf16>,
    } else {
    }
    %c0 = arith.constant 0 : index
    %c0_1 = arith.constant 0 : index
    %3 = vector.load %arg9[%c0, %c0_1] : memref<32x128xbf16, #tpu.memory_space<vmem>>, vector<32x128xbf16>
    %c0_2 = arith.constant 0 : index
    %c0_3 = arith.constant 0 : index
    %c0_4 = arith.constant 0 : index
    %4 = vector.load %arg3[%c0_2, %c0_3, %c0_4] : memref<1x32x128xbf16, #tpu.memory_space<vmem>>, vector<1x32x128xbf16>
    %5 = vector.shape_cast %4 : vector<1x32x128xbf16> to vector<32x128xbf16>
    %c0_5 = arith.constant 0 : index
    %c0_6 = arith.constant 0 : index
    %c0_7 = arith.constant 0 : index
    %6 = vector.load %arg4[%c0_5, %c0_6, %c0_7] : memref<1x32x32xbf16, #tpu.memory_space<vmem>>, vector<1x32x32xbf16>
    %7 = vector.shape_cast %6 : vector<1x32x32xbf16> to vector<32x32xbf16>
    %cst = arith.constant dense<0.000000e+00> : vector<32x128xf32>
    %8 = tpu.matmul %7, %5, %cst {dimension_numbers = #tpu.dot_dimension_numbers<[1], [0], [0], [1], [0, 0, 1, 1], [], []>} : vector<32x32xbf16>, vector<32x128xbf16>, vector<32x128xf32> -> vector<32x128xf32>
    %c0_8 = arith.constant 0 : index
    %c0_9 = arith.constant 0 : index
    %c0_10 = arith.constant 0 : index
    %9 = vector.load %arg5[%c0_8, %c0_9, %c0_10] : memref<1x64x32xbf16, #tpu.memory_space<vmem>>, vector<1x64x32xbf16>
    %10 = vector.shape_cast %9 : vector<1x64x32xbf16> to vector<64x32xbf16>
    %cst_11 = arith.constant dense<0.000000e+00> : vector<64x128xf32>
    %11 = tpu.matmul %10, %3, %cst_11 {dimension_numbers = #tpu.dot_dimension_numbers<[1], [0], [0], [1], [0, 0, 1, 1], [], []>} : vector<64x32xbf16>, vector<32x128xbf16>, vector<64x128xf32> -> vector<64x128xf32>
    %12 = vector.shape_cast %8 : vector<32x128xf32> to vector<4x8x128xf32>
    %13 = arith.truncf %12 : vector<4x8x128xf32> to vector<4x8x128xbf16>
    %14 = vector.extract_strided_slice %11 {offsets = [0, 0], sizes = [32, 128], strides = [1, 1]} : vector<64x128xf32> to vector<32x128xf32>
    %15 = vector.shape_cast %14 : vector<32x128xf32> to vector<4x8x128xf32>
    %16 = arith.truncf %15 : vector<4x8x128xf32> to vector<4x8x128xbf16>
    %17 = vector.extract_strided_slice %11 {offsets = [32, 0], sizes = [32, 128], strides = [1, 1]} : vector<64x128xf32> to vector<32x128xf32>
    %18 = vector.shape_cast %17 : vector<32x128xf32> to vector<4x8x128xf32>
    %19 = arith.truncf %18 : vector<4x8x128xf32> to vector<4x8x128xbf16>
    "tpu.trace_start"() <{level = 10 : i32, message = "hdq,hdk->hqk"}> : () -> ()
    %cst_12 = arith.constant dense<0.000000e+00> : vector<4x128x128xf32>
    %20 = tpu.matmul %13, %16, %cst_12 {dimension_numbers = #tpu.dot_dimension_numbers<[1], [1], [2], [2], [0, 0, 0, 2, 1, 2], [0], [0]>} : vector<4x8x128xbf16>, vector<4x8x128xbf16>, vector<4x128x128xf32> -> vector<4x128x128xf32>
    "tpu.trace_stop"() : () -> ()
    %21 = tpu.iota {dimensions = array<i32: 2>} : vector<1x1x128xi32>
    %c64_i32 = arith.constant 64 : i32
    %22 = vector.broadcast %c64_i32 : i32 to vector<1x1x128xi32>
    %23 = arith.cmpi slt, %21, %22 : vector<1x1x128xi32>
    %cst_13 = arith.constant -1.000000e+30 : f32
    %24 = vector.shape_cast %23 : vector<1x1x128xi1> to vector<1x1x128xi1>
    %25 = vector.broadcast %24 : vector<1x1x128xi1> to vector<4x128x128xi1>
    %26 = vector.broadcast %cst_13 : f32 to vector<4x128x128xf32>
    %27 = arith.select %25, %20, %26 : vector<4x128x128xi1>, vector<4x128x128xf32>
    %cst_14 = arith.constant dense<0xFF800000> : vector<4x128xf32>
    %28 = vector.multi_reduction <maximumf>, %27, %cst_14 [2] : vector<4x128x128xf32> to vector<4x128xf32>
    %29 = vector.shape_cast %28 : vector<4x128xf32> to vector<4x128x1xf32>
    %30 = vector.broadcast %29 : vector<4x128x1xf32> to vector<4x128x128xf32>
    %31 = arith.subf %27, %30 : vector<4x128x128xf32>
    %32 = math.exp %31 : vector<4x128x128xf32>
    %cst_15 = arith.constant dense<0.000000e+00> : vector<4x128xf32>
    %33 = vector.multi_reduction <add>, %32, %cst_15 [2] : vector<4x128x128xf32> to vector<4x128xf32>
    %34 = vector.shape_cast %33 : vector<4x128xf32> to vector<4x128x1xf32>
    %35 = tpu.reciprocal %34 {approx = true} : vector<4x128x1xf32> -> vector<4x128x1xf32>
    %36 = vector.broadcast %35 : vector<4x128x1xf32> to vector<4x128x128xf32>
    %37 = arith.mulf %32, %36 : vector<4x128x128xf32>
    %38 = arith.truncf %37 : vector<4x128x128xf32> to vector<4x128x128xbf16>
    "tpu.trace_start"() <{level = 10 : i32, message = "hdk,hqk->hdq"}> : () -> ()
    %cst_16 = arith.constant dense<0.000000e+00> : vector<4x8x128xf32>
    %39 = tpu.matmul %19, %38, %cst_16 {dimension_numbers = #tpu.dot_dimension_numbers<[2], [2], [1], [1], [0, 0, 0, 1, 1, 1], [0], [0]>} : vector<4x8x128xbf16>, vector<4x128x128xbf16>, vector<4x8x128xf32> -> vector<4x8x128xf32>
    "tpu.trace_stop"() : () -> ()
    %40 = vector.shape_cast %39 : vector<4x8x128xf32> to vector<32x128xf32>
    %41 = arith.addf %40, %8 : vector<32x128xf32>
    %cst_17 = arith.constant dense<0.000000e+00> : vector<128xf32>
    %42 = vector.multi_reduction <add>, %41, %cst_17 [0] : vector<32x128xf32> to vector<128xf32>
    %43 = vector.shape_cast %42 : vector<128xf32> to vector<1x128xf32>
    %cst_18 = arith.constant 3.200000e+01 : f32
    %44 = vector.broadcast %cst_18 : f32 to vector<1x128xf32>
    %45 = arith.divf %43, %44 : vector<1x128xf32>
    %46 = vector.broadcast %45 : vector<1x128xf32> to vector<32x128xf32>
    %47 = arith.subf %41, %46 : vector<32x128xf32>
    %48 = arith.mulf %47, %47 : vector<32x128xf32>
    %cst_19 = arith.constant dense<0.000000e+00> : vector<128xf32>
    %49 = vector.multi_reduction <add>, %48, %cst_19 [0] : vector<32x128xf32> to vector<128xf32>
    %50 = vector.shape_cast %49 : vector<128xf32> to vector<1x128xf32>
    %cst_20 = arith.constant 3.200000e+01 : f32
    %51 = vector.broadcast %cst_20 : f32 to vector<1x128xf32>
    %52 = arith.divf %50, %51 : vector<1x128xf32>
    %cst_21 = arith.constant 9.99999997E-7 : f32
    %53 = vector.broadcast %cst_21 : f32 to vector<1x128xf32>
    %54 = arith.addf %52, %53 : vector<1x128xf32>
    %55 = math.rsqrt %54 : vector<1x128xf32>
    %56 = vector.broadcast %55 : vector<1x128xf32> to vector<32x128xf32>
    %57 = arith.mulf %47, %56 : vector<32x128xf32>
    %c0_22 = arith.constant 0 : index
    %c0_23 = arith.constant 0 : index
    %c0_24 = arith.constant 0 : index
    %58 = vector.load %arg6[%c0_22, %c0_23, %c0_24] : memref<1x32x32xbf16, #tpu.memory_space<vmem>>, vector<1x32x32xbf16>
    %59 = vector.shape_cast %58 : vector<1x32x32xbf16> to vector<32x32xbf16>
    %60 = arith.truncf %57 : vector<32x128xf32> to vector<32x128xbf16>
    %cst_25 = arith.constant dense<0.000000e+00> : vector<32x128xf32>
    %61 = tpu.matmul %59, %60, %cst_25 {dimension_numbers = #tpu.dot_dimension_numbers<[1], [0], [0], [1], [0, 0, 1, 1], [], []>} : vector<32x32xbf16>, vector<32x128xbf16>, vector<32x128xf32> -> vector<32x128xf32>
    %c0_26 = arith.constant 0 : index
    %c0_27 = arith.constant 0 : index
    %c0_28 = arith.constant 0 : index
    %62 = vector.load %arg7[%c0_26, %c0_27, %c0_28] : memref<1x32x1xf32, #tpu.memory_space<vmem>>, vector<1x32x1xf32>
    %63 = vector.shape_cast %62 : vector<1x32x1xf32> to vector<32x1xf32>
    %64 = vector.broadcast %63 : vector<32x1xf32> to vector<32x128xf32>
    %65 = arith.addf %61, %64 : vector<32x128xf32>
    %66 = arith.truncf %65 : vector<32x128xf32> to vector<32x128xbf16>
    %c0_29 = arith.constant 0 : index
    %c0_30 = arith.constant 0 : index
    %67 = vector.load %arg9[%c0_29, %c0_30] : memref<32x128xbf16, #tpu.memory_space<vmem>>, vector<32x128xbf16>
    tpu.vector_store %arg9[%c0_29, %c0_30], %66 {strides = array<i32>} : memref<32x128xbf16, #tpu.memory_space<vmem>>, vector<32x128xbf16>,
    %c1_i32 = arith.constant 1 : i32
    %68 = arith.cmpi eq, %arg1, %c1_i32 : i32
    %69 = arith.extui %68 : i1 to i32
    %c0_i32_31 = arith.constant 0 : i32
    %70 = arith.cmpi ne, %69, %c0_i32_31 : i32
    scf.if %70 {
      %c0_32 = arith.constant 0 : index
      %c0_33 = arith.constant 0 : index
      %c0_34 = arith.constant 0 : index
      %71 = vector.load %arg8[%c0_32, %c0_33, %c0_34] : memref<1x32x128xf32, #tpu.memory_space<vmem>>, vector<1x32x128xf32>
      %72 = vector.shape_cast %71 : vector<1x32x128xf32> to vector<32x128xf32>
      %73 = vector.shape_cast %65 : vector<32x128xf32> to vector<1x32x128xf32>
      tpu.vector_store %arg8[%c0_32, %c0_33, %c0_34], %73 {strides = array<i32>} : memref<1x32x128xf32, #tpu.memory_space<vmem>>, vector<1x32x128xf32>,
    } else {
    }
    return
  }
  func.func @transform_0(%arg0: i32, %arg1: i32) -> (i32, i32, i32) {
    %c0_i32 = arith.constant 0 : i32
    %c0_i32_0 = arith.constant 0 : i32
    %c0_i32_1 = arith.constant 0 : i32
    return %arg0, %c0_i32, %c0_i32_0 : i32, i32, i32
  }
  func.func @transform_1(%arg0: i32, %arg1: i32) -> (i32, i32, i32) {
    %c0_i32 = arith.constant 0 : i32
    %c0_i32_0 = arith.constant 0 : i32
    %c0_i32_1 = arith.constant 0 : i32
    return %arg0, %c0_i32, %c0_i32_0 : i32, i32, i32
  }
  func.func @transform_2(%arg0: i32, %arg1: i32) -> (i32, i32, i32) {
    %c0_i32 = arith.constant 0 : i32
    %c0_i32_0 = arith.constant 0 : i32
    %c0_i32_1 = arith.constant 0 : i32
    return %arg1, %c0_i32, %c0_i32_0 : i32, i32, i32
  }
  func.func @transform_3(%arg0: i32, %arg1: i32) -> (i32, i32, i32) {
    %c0_i32 = arith.constant 0 : i32
    %c0_i32_0 = arith.constant 0 : i32
    %c0_i32_1 = arith.constant 0 : i32
    return %arg1, %c0_i32, %c0_i32_0 : i32, i32, i32
  }
  func.func @transform_4(%arg0: i32, %arg1: i32) -> (i32, i32, i32) {
    %c0_i32 = arith.constant 0 : i32
    %c0_i32_0 = arith.constant 0 : i32
    %c0_i32_1 = arith.constant 0 : i32
    return %arg1, %c0_i32, %c0_i32_0 : i32, i32, i32
  }
  func.func @transform_5(%arg0: i32, %arg1: i32) -> (i32, i32, i32) {
    %c0_i32 = arith.constant 0 : i32
    %c0_i32_0 = arith.constant 0 : i32
    %c0_i32_1 = arith.constant 0 : i32
    return %arg1, %c0_i32, %c0_i32_0 : i32, i32, i32
  }
  func.func @transform_6(%arg0: i32, %arg1: i32) -> (i32, i32, i32) {
    %c0_i32 = arith.constant 0 : i32
    %c0_i32_0 = arith.constant 0 : i32
    %c0_i32_1 = arith.constant 0 : i32
    return %arg0, %c0_i32, %c0_i32_0 : i32, i32, i32
  }
}

</mosaic_0001>

<llo_original>
// kernel: component_attention_forward.1
$region0: #{component_attention_forward.1}
  #allocation0 [shape = 'u32[]', space=smem, size = 0x4, offset = 0x4, fixed_abs, tag = 'smem constant byte address 0x4 - core index']
  #allocation1 [shape = 'u32[72,128]{1,0:T(1,128)}', space=vmem, size = 0x9000, scoped, tag = 'internal scratch']
  #allocation2 [shape = 'bf16[32,128]{1,0:T(8,128)(2,1)}', space=vmem, size = 0x2000, scoped, tag = 'scratch operand']
  %s0 = inlined_call_operand.vmem [shape: bf16[2,32,128], index: 0, kind: input, shape index: {}]
  %s1 = inlined_call_operand.vmem [shape: bf16[2,32,128], index: 1, kind: input, shape index: {}]
  %s2 = inlined_call_operand.vmem [shape: bf16[2,32,32], index: 2, kind: input, shape index: {}]
  %s3 = inlined_call_operand.vmem [shape: bf16[2,64,32], index: 3, kind: input, shape index: {}]
  %s4 = inlined_call_operand.vmem [shape: bf16[2,32,32], index: 4, kind: input, shape index: {}]
  %s5 = inlined_call_operand.vmem [shape: f32[2,32,1], index: 5, kind: input, shape index: {}]
  %s6 = inlined_call_operand.vmem [shape: f32[2,32,128], index: 6, kind: output, shape index: {}]
  %s7 = sld [smem:[#allocation0]]
  $region65: #{component_attention_forward.1} parent=0
    _
  %s9 = ssub.s32 1, %s7
  %s10 = scalar_select 0, %s9, %s7
  loop: start=0, step=1, limit=6
  $region2: #{component_attention_forward.1} parent=0 // loop_pre_header
    _
  $region3: #{component_attention_forward.1} parent=0 // loop_header
    %s12 = sphi 0, %s16
    %p13 = scmp.ge.s32.totalorder %s12, 6
    %s19 = sphi 0, %s31
    %s20 = sphi 0, %s27
    %s21 = sphi 0, %s19
    %s22 = sphi 0, %s20
    %s23 = sphi 0, %s21
    %s24 = sphi 0, %s22
    %s34 = sphi 0, %s36
    %s37 = sphi 0, %s34
    %s38 = sphi 0, %s37
    %s54 = sphi 0, %s38
    %s60 = sphi 0, %s62
    %s63 = sphi 0, %s60
    %s64 = sphi 0, %s63
    %s80 = sphi 0, %s64
    %s86 = sphi 0, %s88
    %s89 = sphi 0, %s86
    %s90 = sphi 0, %s89
    %s106 = sphi 0, %s90
    %s112 = sphi 0, %s114
    %s115 = sphi 0, %s112
    %s116 = sphi 0, %s115
    %s132 = sphi 0, %s116
    %s138 = sphi 0, %s140
    %s141 = sphi 0, %s138
    %s142 = sphi 0, %s141
    %s158 = sphi 0, %s142
    %s164 = sphi 0, %s166
    %s167 = sphi 0, %s164
    %s168 = sphi 0, %s167
    %s184 = sphi 0, %s168
    %s190 = sphi 0, %s192
    %s193 = sphi 0, %s190
    %s194 = sphi 0, %s193
    %s210 = sphi 0, %s194
  $region4: #{component_attention_forward.1} parent=0 // loop_header_branch
    %15 = sbr.rel (%p13) target = $region8
  $region5: #{component_attention_forward.1} parent=0 // loop_body
    %s17 = ssub.s32 %s12, 1
    %s18 = ssub.s32 %s12, 2
    %s25 = sadd.s32 1, %s20
    %p26 = scmp.ge.s32.totalorder %s25, 2
    %s27 = scalar_select %p26, 0, %s25
    %s28 = sadd.s32 1, %s19
    %s29 = scalar_select %p26, %s28, %s19
    %p30 = scmp.ge.s32.totalorder %s29, 2
    %s31 = scalar_select %p30, 0, %s29
    %s32 = ssub.s32 %s19, %s31
    %p33 = scmp.eq.s32.totalorder %s32, 0
    %s35 = sadd.s32 %s34, 1
    %s36 = scalar_select %p33, %s34, %s35
    %p39 = pneg %p33
    %p40 = scmp.eq.s32.totalorder %s12, 3
    %p41 = por %p39, %p40
    %p42 = scmp.ne.s32.totalorder %s34, %s37
    %p43 = scmp.eq.s32.totalorder %s12, 0
    %p44 = por %p42, %p43
    %p45 = scmp.ne.s32.totalorder %s34, %s37
    %p46 = scmp.eq.s32.totalorder %s17, 3
    %p47 = por %p45, %p46
    %p48 = scmp.ne.s32.totalorder %s37, %s38
    %p49 = scmp.eq.s32.totalorder %s17, 0
    %p50 = por %p48, %p49
    %p51 = scmp.ne.s32.totalorder %s37, %s38
    %p52 = scmp.eq.s32.totalorder %s18, 3
    %p53 = por %p51, %p52
    %p55 = scmp.ne.s32.totalorder %s38, %s54
    %p56 = scmp.eq.s32.totalorder %s18, 0
    %p57 = por %p55, %p56
    %s58 = ssub.s32 %s19, %s31
    %p59 = scmp.eq.s32.totalorder %s58, 0
    %s61 = sadd.s32 %s60, 1
    %s62 = scalar_select %p59, %s60, %s61
    %p65 = pneg %p59
    %p66 = scmp.eq.s32.totalorder %s12, 3
    %p67 = por %p65, %p66
    %p68 = scmp.ne.s32.totalorder %s60, %s63
    %p69 = scmp.eq.s32.totalorder %s12, 0
    %p70 = por %p68, %p69
    %p71 = scmp.ne.s32.totalorder %s60, %s63
    %p72 = scmp.eq.s32.totalorder %s17, 3
    %p73 = por %p71, %p72
    %p74 = scmp.ne.s32.totalorder %s63, %s64
    %p75 = scmp.eq.s32.totalorder %s17, 0
    %p76 = por %p74, %p75
    %p77 = scmp.ne.s32.totalorder %s63, %s64
    %p78 = scmp.eq.s32.totalorder %s18, 3
    %p79 = por %p77, %p78
    %p81 = scmp.ne.s32.totalorder %s64, %s80
    %p82 = scmp.eq.s32.totalorder %s18, 0
    %p83 = por %p81, %p82
    %s84 = ssub.s32 %s20, %s27
    %p85 = scmp.eq.s32.totalorder %s84, 0
    %s87 = sadd.s32 %s86, 1
    %s88 = scalar_select %p85, %s86, %s87
    %p91 = pneg %p85
    %p92 = scmp.eq.s32.totalorder %s12, 3
    %p93 = por %p91, %p92
    %p94 = scmp.ne.s32.totalorder %s86, %s89
    %p95 = scmp.eq.s32.totalorder %s12, 0
    %p96 = por %p94, %p95
    %p97 = scmp.ne.s32.totalorder %s86, %s89
    %p98 = scmp.eq.s32.totalorder %s17, 3
    %p99 = por %p97, %p98
    %p100 = scmp.ne.s32.totalorder %s89, %s90
    %p101 = scmp.eq.s32.totalorder %s17, 0
    %p102 = por %p100, %p101
    %p103 = scmp.ne.s32.totalorder %s89, %s90
    %p104 = scmp.eq.s32.totalorder %s18, 3
    %p105 = por %p103, %p104
    %p107 = scmp.ne.s32.totalorder %s90, %s106
    %p108 = scmp.eq.s32.totalorder %s18, 0
    %p109 = por %p107, %p108
    %s110 = ssub.s32 %s20, %s27
    %p111 = scmp.eq.s32.totalorder %s110, 0
    %s113 = sadd.s32 %s112, 1
    %s114 = scalar_select %p111, %s112, %s113
    %p117 = pneg %p111
    %p118 = scmp.eq.s32.totalorder %s12, 3
    %p119 = por %p117, %p118
    %p120 = scmp.ne.s32.totalorder %s112, %s115
    %p121 = scmp.eq.s32.totalorder %s12, 0
    %p122 = por %p120, %p121
    %p123 = scmp.ne.s32.totalorder %s112, %s115
    %p124 = scmp.eq.s32.totalorder %s17, 3
    %p125 = por %p123, %p124
    %p126 = scmp.ne.s32.totalorder %s115, %s116
    %p127 = scmp.eq.s32.totalorder %s17, 0
    %p128 = por %p126, %p127
    %p129 = scmp.ne.s32.totalorder %s115, %s116
    %p130 = scmp.eq.s32.totalorder %s18, 3
    %p131 = por %p129, %p130
    %p133 = scmp.ne.s32.totalorder %s116, %s132
    %p134 = scmp.eq.s32.totalorder %s18, 0
    %p135 = por %p133, %p134
    %s136 = ssub.s32 %s20, %s27
    %p137 = scmp.eq.s32.totalorder %s136, 0
    %s139 = sadd.s32 %s138, 1
    %s140 = scalar_select %p137, %s138, %s139
    %p143 = pneg %p137
    %p144 = scmp.eq.s32.totalorder %s12, 3
    %p145 = por %p143, %p144
    %p146 = scmp.ne.s32.totalorder %s138, %s141
    %p147 = scmp.eq.s32.totalorder %s12, 0
    %p148 = por %p146, %p147
    %p149 = scmp.ne.s32.totalorder %s138, %s141
    %p150 = scmp.eq.s32.totalorder %s17, 3
    %p151 = por %p149, %p150
    %p152 = scmp.ne.s32.totalorder %s141, %s142
    %p153 = scmp.eq.s32.totalorder %s17, 0
    %p154 = por %p152, %p153
    %p155 = scmp.ne.s32.totalorder %s141, %s142
    %p156 = scmp.eq.s32.totalorder %s18, 3
    %p157 = por %p155, %p156
    %p159 = scmp.ne.s32.totalorder %s142, %s158
    %p160 = scmp.eq.s32.totalorder %s18, 0
    %p161 = por %p159, %p160
    %s162 = ssub.s32 %s20, %s27
    %p163 = scmp.eq.s32.totalorder %s162, 0
    %s165 = sadd.s32 %s164, 1
    %s166 = scalar_select %p163, %s164, %s165
    %p169 = pneg %p163
    %p170 = scmp.eq.s32.totalorder %s12, 3
    %p171 = por %p169, %p170
    %p172 = scmp.ne.s32.totalorder %s164, %s167
    %p173 = scmp.eq.s32.totalorder %s12, 0
    %p174 = por %p172, %p173
    %p175 = scmp.ne.s32.totalorder %s164, %s167
    %p176 = scmp.eq.s32.totalorder %s17, 3
    %p177 = por %p175, %p176
    %p178 = scmp.ne.s32.totalorder %s167, %s168
    %p179 = scmp.eq.s32.totalorder %s17, 0
    %p180 = por %p178, %p179
    %p181 = scmp.ne.s32.totalorder %s167, %s168
    %p182 = scmp.eq.s32.totalorder %s18, 3
    %p183 = por %p181, %p182
    %p185 = scmp.ne.s32.totalorder %s168, %s184
    %p186 = scmp.eq.s32.totalorder %s18, 0
    %p187 = por %p185, %p186
    %s188 = ssub.s32 %s19, %s31
    %p189 = scmp.eq.s32.totalorder %s188, 0
    %s191 = sadd.s32 %s190, 1
    %s192 = scalar_select %p189, %s190, %s191
    %p195 = pneg %p189
    %p196 = scmp.eq.s32.totalorder %s12, 3
    %p197 = por %p195, %p196
    %p198 = scmp.ne.s32.totalorder %s190, %s193
    %p199 = scmp.eq.s32.totalorder %s12, 0
    %p200 = por %p198, %p199
    %p201 = scmp.ne.s32.totalorder %s190, %s193
    %p202 = scmp.eq.s32.totalorder %s17, 3
    %p203 = por %p201, %p202
    %p204 = scmp.ne.s32.totalorder %s193, %s194
    %p205 = scmp.eq.s32.totalorder %s17, 0
    %p206 = por %p204, %p205
    %p207 = scmp.ne.s32.totalorder %s193, %s194
    %p208 = scmp.eq.s32.totalorder %s18, 3
    %p209 = por %p207, %p208
    %p211 = scmp.ne.s32.totalorder %s194, %s210
    %p212 = scmp.eq.s32.totalorder %s18, 0
    %p213 = por %p211, %p212
    %p214 = scmp.le.s32.totalorder 1, %s12
    %p215 = scmp.lt.s32.totalorder %s12, 5
    %p216 = pnand %p214, %p215
    %p217 = pneg %p216
    // Predicated region
    $region9: #{component_attention_forward.1} parent=5 // pred_check
      _
    $region10: #{component_attention_forward.1} parent=5 // pred_check_branch
      %219 = sbr.rel (%p216) target = $region12
    $region11: #{component_attention_forward.1} parent=5 // pred_region
      %s220 = ssub.s32 %s12, 1
    $region12: #{component_attention_forward.1} parent=5 // pred_fallthru
      _
    %p221 = scmp.lt.s32.totalorder %s12, 4
    // Predicated region
    $region13: #{component_attention_forward.1} parent=5 // pred_check
      %p222 = pneg %p221
    $region14: #{component_attention_forward.1} parent=5 // pred_check_branch
      %224 = sbr.rel (%p222) target = $region16
    $region15: #{component_attention_forward.1} parent=5 // pred_region
      // Predicated region
      $region17: #{component_attention_forward.1} parent=15 // pred_check
        %p225 = pneg %p44
      $region18: #{component_attention_forward.1} parent=15 // pred_check_branch
        %227 = sbr.rel (%p225) target = $region20
      $region19: #{component_attention_forward.1} parent=15 // pred_region
        %p228 = scmp.lt.s32.totalorder %s19, 1
        %s229 = scalar_select %p228, %s19, 1
        %s230 = smul.addr %s229, 4
        %s231 = smul.addr %s230, 4
        %s232 = scalar_lea.vmem %s0, %s231
      $region20: #{component_attention_forward.1} parent=15 // pred_fallthru
        _
      // Predicated region
      $region21: #{component_attention_forward.1} parent=15 // pred_check
        %p233 = pneg %p70
      $region22: #{component_attention_forward.1} parent=15 // pred_check_branch
        %235 = sbr.rel (%p233) target = $region24
      $region23: #{component_attention_forward.1} parent=15 // pred_region
        %p236 = scmp.lt.s32.totalorder %s19, 1
        %s237 = scalar_select %p236, %s19, 1
        %s238 = smul.addr %s237, 4
        %s239 = smul.addr %s238, 4
        %s240 = scalar_lea.vmem %s1, %s239
      $region24: #{component_attention_forward.1} parent=15 // pred_fallthru
        _
      // Predicated region
      $region25: #{component_attention_forward.1} parent=15 // pred_check
        %p241 = pneg %p96
      $region26: #{component_attention_forward.1} parent=15 // pred_check_branch
        %243 = sbr.rel (%p241) target = $region28
      $region27: #{component_attention_forward.1} parent=15 // pred_region
        %p244 = scmp.lt.s32.totalorder %s20, 1
        %s245 = scalar_select %p244, %s20, 1
        %s246 = smul.addr %s245, 4
        %s247 = smul.addr %s246, 4
        %s248 = scalar_lea.vmem %s2, %s247
      $region28: #{component_attention_forward.1} parent=15 // pred_fallthru
        _
      // Predicated region
      $region29: #{component_attention_forward.1} parent=15 // pred_check
        %p249 = pneg %p122
      $region30: #{component_attention_forward.1} parent=15 // pred_check_branch
        %251 = sbr.rel (%p249) target = $region32
      $region31: #{component_attention_forward.1} parent=15 // pred_region
        %p252 = scmp.lt.s32.totalorder %s20, 1
        %s253 = scalar_select %p252, %s20, 1
        %s254 = smul.addr %s253, 8
        %s255 = smul.addr %s254, 4
        %s256 = scalar_lea.vmem %s3, %s255
      $region32: #{component_attention_forward.1} parent=15 // pred_fallthru
        _
      // Predicated region
      $region33: #{component_attention_forward.1} parent=15 // pred_check
        %p257 = pneg %p148
      $region34: #{component_attention_forward.1} parent=15 // pred_check_branch
        %259 = sbr.rel (%p257) target = $region36
      $region35: #{component_attention_forward.1} parent=15 // pred_region
        %p260 = scmp.lt.s32.totalorder %s20, 1
        %s261 = scalar_select %p260, %s20, 1
        %s262 = smul.addr %s261, 4
        %s263 = smul.addr %s262, 4
        %s264 = scalar_lea.vmem %s4, %s263
      $region36: #{component_attention_forward.1} parent=15 // pred_fallthru
        _
      // Predicated region
      $region37: #{component_attention_forward.1} parent=15 // pred_check
        %p265 = pneg %p174
      $region38: #{component_attention_forward.1} parent=15 // pred_check_branch
        %267 = sbr.rel (%p265) target = $region40
      $region39: #{component_attention_forward.1} parent=15 // pred_region
        %p268 = scmp.lt.s32.totalorder %s20, 1
        %s269 = scalar_select %p268, %s20, 1
        %s270 = smul.addr %s269, 4
        %s271 = smul.addr %s270, 8
        %s272 = scalar_lea.vmem %s5, %s271
      $region40: #{component_attention_forward.1} parent=15 // pred_fallthru
        _
    $region16: #{component_attention_forward.1} parent=5 // pred_fallthru
      _
    %p273 = scmp.le.s32.totalorder 1, %s12
    %p274 = scmp.lt.s32.totalorder %s12, 5
    %p275 = pnand %p273, %p274
    %p276 = pneg %p275
    // Predicated region
    $region41: #{component_attention_forward.1} parent=5 // pred_check
      _
    $region42: #{component_attention_forward.1} parent=5 // pred_check_branch
      %278 = sbr.rel (%p275) target = $region44
    $region43: #{component_attention_forward.1} parent=5 // pred_region
      %s279 = ssub.s32 %s12, 1
      %p280 = scmp.lt.s32.totalorder %s21, 1
      %s281 = scalar_select %p280, %s21, 1
      %s282 = smul.addr %s281, 4
      %s283 = smul.addr %s282, 4
      %s284 = scalar_lea.vmem %s0, %s283
      %p285 = pneg %p50
      %p286 = pneg %p47
      %p287 = scmp.lt.s32.totalorder %s21, 1
      %s288 = scalar_select %p287, %s21, 1
      %s289 = smul.addr %s288, 4
      %s290 = smul.addr %s289, 4
      %s291 = scalar_lea.vmem %s1, %s290
      %p292 = pneg %p76
      %p293 = pneg %p73
      %p294 = scmp.lt.s32.totalorder %s22, 1
      %s295 = scalar_select %p294, %s22, 1
      %s296 = smul.addr %s295, 4
      %s297 = smul.addr %s296, 4
      %s298 = scalar_lea.vmem %s2, %s297
      %p299 = pneg %p102
      %p300 = pneg %p99
      %p301 = scmp.lt.s32.totalorder %s22, 1
      %s302 = scalar_select %p301, %s22, 1
      %s303 = smul.addr %s302, 8
      %s304 = smul.addr %s303, 4
      %s305 = scalar_lea.vmem %s3, %s304
      %p306 = pneg %p128
      %p307 = pneg %p125
      %p308 = scmp.lt.s32.totalorder %s22, 1
      %s309 = scalar_select %p308, %s22, 1
      %s310 = smul.addr %s309, 4
      %s311 = smul.addr %s310, 4
      %s312 = scalar_lea.vmem %s4, %s311
      %p313 = pneg %p154
      %p314 = pneg %p151
      %p315 = scmp.lt.s32.totalorder %s22, 1
      %s316 = scalar_select %p315, %s22, 1
      %s317 = smul.addr %s316, 4
      %s318 = smul.addr %s317, 8
      %s319 = scalar_lea.vmem %s5, %s318
      %p320 = pneg %p180
      %p321 = pneg %p177
      %p322 = pneg %p206
      %p323 = pneg %p203
      %p324 = scmp.lt.s32.totalorder %s21, 1
      %s325 = scalar_select %p324, %s21, 1
      %s326 = smul.addr %s325, 4
      %s327 = smul.addr %s326, 8
      %s328 = scalar_lea.vmem %s6, %s327
      %p329 = scmp.lt.s32.totalorder %s21, 1
      %s330 = scalar_select %p329, %s21, 1
      %s331 = smul.addr %s330, 4
      %s332 = smul.addr %s331, 4
      %s333 = scalar_lea.vmem %s0, %s332
      %p334 = scmp.lt.s32.totalorder %s21, 1
      %s335 = scalar_select %p334, %s21, 1
      %s336 = smul.addr %s335, 4
      %s337 = smul.addr %s336, 4
      %s338 = scalar_lea.vmem %s1, %s337
      %p339 = scmp.lt.s32.totalorder %s22, 1
      %s340 = scalar_select %p339, %s22, 1
      %s341 = smul.addr %s340, 4
      %s342 = smul.addr %s341, 4
      %s343 = scalar_lea.vmem %s2, %s342
      %p344 = scmp.lt.s32.totalorder %s22, 1
      %s345 = scalar_select %p344, %s22, 1
      %s346 = smul.addr %s345, 8
      %s347 = smul.addr %s346, 4
      %s348 = scalar_lea.vmem %s3, %s347
      %p349 = scmp.lt.s32.totalorder %s22, 1
      %s350 = scalar_select %p349, %s22, 1
      %s351 = smul.addr %s350, 4
      %s352 = smul.addr %s351, 4
      %s353 = scalar_lea.vmem %s4, %s352
      %p354 = scmp.lt.s32.totalorder %s22, 1
      %s355 = scalar_select %p354, %s22, 1
      %s356 = smul.addr %s355, 4
      %s357 = smul.addr %s356, 8
      %s358 = scalar_lea.vmem %s5, %s357
      %p359 = scmp.lt.s32.totalorder %s21, 1
      %s360 = scalar_select %p359, %s21, 1
      %s361 = smul.addr %s360, 4
      %s362 = smul.addr %s361, 8
      %s363 = scalar_lea.vmem %s6, %s362
      %p365 = scmp.eq.s32.totalorder %s22, 0
      // Predicated region
      $region45: #{component_attention_forward.1} parent=43 // pred_check
        %p366 = pneg %p365
      $region46: #{component_attention_forward.1} parent=43 // pred_check_branch
        %368 = sbr.rel (%p366) target = $region48
      $region47: #{component_attention_forward.1} parent=43 // pred_region
        %v369 = vld [vmem:[%s333] sm:$0xf]
        %v370 = vld [vmem:[%s333 + $0x4] sm:$0xf]
        %v371 = vld [vmem:[%s333 + $0x8] sm:$0xf]
        %v372 = vld [vmem:[%s333 + $0xc] sm:$0xf]
        %373 = vst [vmem:[#allocation2] sm:$0xf] %v369
        %374 = vst [vmem:[#allocation2 + $0x4] sm:$0xf] %v370
        %375 = vst [vmem:[#allocation2 + $0x8] sm:$0xf] %v371
        %376 = vst [vmem:[#allocation2 + $0xc] sm:$0xf] %v372
      $region48: #{component_attention_forward.1} parent=43 // pred_fallthru
        _
      %v377 = vld [vmem:[#allocation2] sm:$0xf]
      %v378 = vld [vmem:[#allocation2 + $0x4] sm:$0xf]
      %v379 = vld [vmem:[#allocation2 + $0x8] sm:$0xf]
      %v380 = vld [vmem:[#allocation2 + $0xc] sm:$0xf]
      %v381 = vld [vmem:[%s338] sm:$0xf]
      %v382 = vld [vmem:[%s338 + $0x4] sm:$0xf]
      %v383 = vld [vmem:[%s338 + $0x8] sm:$0xf]
      %v384 = vld [vmem:[%s338 + $0xc] sm:$0xf]
      %v385 = vld [vmem:[%s343] sm:$0xf]
      %v386 = vld [vmem:[%s343 + $0x4] sm:$0xf]
      %v387 = vld [vmem:[%s343 + $0x8] sm:$0xf]
      %v388 = vld [vmem:[%s343 + $0xc] sm:$0xf]
      %v393 = vunpack.c.l.b16 %v385
      %v394 = vunpack.c.l.b16 %v386
      %v395 = vunpack.c.l.b16 %v387
      %v396 = vunpack.c.l.b16 %v388
      %v397 = vpack.c.b16 %v394, %v393
      %v398 = vpack.c.b16 %v396, %v395
      %v403 = vunpack.c.l.b16 %v381
      %v404 = vunpack.c.l.b16 %v382
      %v405 = vunpack.c.l.b16 %v383
      %v406 = vunpack.c.l.b16 %v384
      %v407 = vpack.c.b16 %v404, %v403
      %v408 = vpack.c.b16 %v406, %v405
      %vm411 = vcmask 261120
      %v413 = vsel %vm411, %v397, 0
      %v416 = vsel %vm411, %v398, 0
      %418 = vmatpush.bf16.msra.mxu0 0
      %419 = vmatpush.bf16.msra.mxu0 0
      %420 = vmatpush.bf16.msra.mxu0 0
      %421 = vmatpush.bf16.msra.mxu0 0
      %422 = vmatpush.bf16.msra.mxu0 0
      %423 = vmatpush.bf16.msra.mxu0 0
      %424 = vmatpush.bf16.msra.mxu0 %v408
      %425 = vmatpush.bf16.msra.mxu0 %v407
      %426 = vmatmul.bf16.gmra.mxu0 %v413
      %v427 = vpop.f32.mrf.mxu0
      %v428 = vadd.f32 0.0, %v427
      %v429 = vpop.f32.mrf.mxu0
      %v430 = vadd.f32 0.0, %v429
      %431 = vmatmul.bf16.gmra.mxu0 %v416
      %v432 = vpop.f32.mrf.mxu0
      %v433 = vadd.f32 0.0, %v432
      %v434 = vpop.f32.mrf.mxu0
      %v435 = vadd.f32 0.0, %v434
      %436 = vdwg.mxu0
      %v437 = vld [vmem:[%s348] sm:$0xf]
      %v438 = vld [vmem:[%s348 + $0x4] sm:$0xf]
      %v439 = vld [vmem:[%s348 + $0x8] sm:$0xf]
      %v440 = vld [vmem:[%s348 + $0xc] sm:$0xf]
      %v441 = vld [vmem:[%s348 + $0x10] sm:$0xf]
      %v442 = vld [vmem:[%s348 + $0x14] sm:$0xf]
      %v443 = vld [vmem:[%s348 + $0x18] sm:$0xf]
      %v444 = vld [vmem:[%s348 + $0x1c] sm:$0xf]
      %v453 = vunpack.c.l.b16 %v437
      %v454 = vunpack.c.l.b16 %v438
      %v455 = vunpack.c.l.b16 %v439
      %v456 = vunpack.c.l.b16 %v440
      %v457 = vunpack.c.l.b16 %v441
      %v458 = vunpack.c.l.b16 %v442
      %v459 = vunpack.c.l.b16 %v443
      %v460 = vunpack.c.l.b16 %v444
      %v461 = vpack.c.b16 %v454, %v453
      %v462 = vpack.c.b16 %v456, %v455
      %v463 = vpack.c.b16 %v458, %v457
      %v464 = vpack.c.b16 %v460, %v459
      %v469 = vunpack.c.l.b16 %v377
      %v470 = vunpack.c.l.b16 %v378
      %v471 = vunpack.c.l.b16 %v379
      %v472 = vunpack.c.l.b16 %v380
      %v473 = vpack.c.b16 %v470, %v469
      %v474 = vpack.c.b16 %v472, %v471
      %v478 = vsel %vm411, %v461, 0
      %v481 = vsel %vm411, %v462, 0
      %v484 = vsel %vm411, %v463, 0
      %v487 = vsel %vm411, %v464, 0
      %489 = vmatpush.bf16.msra.mxu0 0
      %490 = vmatpush.bf16.msra.mxu0 0
      %491 = vmatpush.bf16.msra.mxu0 0
      %492 = vmatpush.bf16.msra.mxu0 0
      %493 = vmatpush.bf16.msra.mxu0 0
      %494 = vmatpush.bf16.msra.mxu0 0
      %495 = vmatpush.bf16.msra.mxu0 %v474
      %496 = vmatpush.bf16.msra.mxu0 %v473
      %497 = vmatmul.bf16.gmra.mxu0 %v478
      %v498 = vpop.f32.mrf.mxu0
      %v499 = vadd.f32 0.0, %v498
      %v500 = vpop.f32.mrf.mxu0
      %v501 = vadd.f32 0.0, %v500
      %502 = vmatmul.bf16.gmra.mxu0 %v481
      %v503 = vpop.f32.mrf.mxu0
      %v504 = vadd.f32 0.0, %v503
      %v505 = vpop.f32.mrf.mxu0
      %v506 = vadd.f32 0.0, %v505
      %507 = vmatmul.bf16.gmra.mxu0 %v484
      %v508 = vpop.f32.mrf.mxu0
      %v509 = vadd.f32 0.0, %v508
      %v510 = vpop.f32.mrf.mxu0
      %v511 = vadd.f32 0.0, %v510
      %512 = vmatmul.bf16.gmra.mxu0 %v487
      %v513 = vpop.f32.mrf.mxu0
      %v514 = vadd.f32 0.0, %v513
      %v515 = vpop.f32.mrf.mxu0
      %v516 = vadd.f32 0.0, %v515
      %517 = vdwg.mxu0
      %v518 = vpack.c.bf16 %v428, %v428
      %v519 = vpack.c.bf16 %v430, %v430
      %v520 = vpack.c.bf16 %v433, %v433
      %v521 = vpack.c.bf16 %v435, %v435
      %v522 = vpack.c.bf16 %v499, %v499
      %v523 = vpack.c.bf16 %v501, %v501
      %v524 = vpack.c.bf16 %v504, %v504
      %v525 = vpack.c.bf16 %v506, %v506
      %v526 = vpack.c.bf16 %v509, %v509
      %v527 = vpack.c.bf16 %v511, %v511
      %v528 = vpack.c.bf16 %v514, %v514
      %v529 = vpack.c.bf16 %v516, %v516
      %530 = vxpose.xlu0.c.b16.start [1/8] %v518, 128
      %531 = vxpose.xlu0.c.b16.cont [2/8] 0, 128
      %532 = vxpose.xlu0.c.b16.cont [3/8] 0, 128
      %533 = vxpose.xlu0.c.b16.cont [4/8] 0, 128
      %534 = vxpose.xlu0.c.b16.cont [5/8] 0, 128
      %535 = vxpose.xlu0.c.b16.cont [6/8] 0, 128
      %536 = vxpose.xlu0.c.b16.cont [7/8] 0, 128
      %537 = vxpose.xlu0.c.b16.end [8/8] 0, 128
      %v538 = vpop.trf.xlu0
      %v539 = vpop.trf.xlu0
      %v540 = vpop.trf.xlu0
      %v541 = vpop.trf.xlu0
      %v542 = vpop.trf.xlu0
      %v543 = vpop.trf.xlu0
      %v544 = vpop.trf.xlu0
      %v545 = vpop.trf.xlu0
      %vm546 = vcmask 64512
      %v548 = vsel %vm546, %v538, 0
      %v551 = vsel %vm546, %v539, 0
      %v554 = vsel %vm546, %v540, 0
      %v557 = vsel %vm546, %v541, 0
      %v560 = vsel %vm546, %v542, 0
      %v563 = vsel %vm546, %v543, 0
      %v566 = vsel %vm546, %v544, 0
      %v569 = vsel %vm546, %v545, 0
      %vm571 = vcmask 1043456
      %v573 = vsel %vm571, %v522, 0
      %575 = vmatpush.bf16.msra.mxu0 0
      %576 = vmatpush.bf16.msra.mxu0 0
      %577 = vmatpush.bf16.msra.mxu0 0
      %578 = vmatpush.bf16.msra.mxu0 0
      %579 = vmatpush.bf16.msra.mxu0 0
      %580 = vmatpush.bf16.msra.mxu0 0
      %581 = vmatpush.bf16.msra.mxu0 0
      %582 = vmatpush.bf16.msra.mxu0 %v573
      %583 = vmatmul.bf16.gmra.mxu0 %v548
      %v584 = vpop.f32.mrf.mxu0
      %v585 = vadd.f32 0.0, %v584
      %v586 = vpop.f32.mrf.mxu0
      %v587 = vadd.f32 0.0, %v586
      %588 = vmatmul.bf16.gmra.mxu0 %v551
      %v589 = vpop.f32.mrf.mxu0
      %v590 = vadd.f32 0.0, %v589
      %v591 = vpop.f32.mrf.mxu0
      %v592 = vadd.f32 0.0, %v591
      %593 = vmatmul.bf16.gmra.mxu0 %v554
      %v594 = vpop.f32.mrf.mxu0
      %v595 = vadd.f32 0.0, %v594
      %v596 = vpop.f32.mrf.mxu0
      %v597 = vadd.f32 0.0, %v596
      %598 = vmatmul.bf16.gmra.mxu0 %v557
      %v599 = vpop.f32.mrf.mxu0
      %v600 = vadd.f32 0.0, %v599
      %v601 = vpop.f32.mrf.mxu0
      %v602 = vadd.f32 0.0, %v601
      %603 = vmatmul.bf16.gmra.mxu0 %v560
      %v604 = vpop.f32.mrf.mxu0
      %v605 = vadd.f32 0.0, %v604
      %v606 = vpop.f32.mrf.mxu0
      %v607 = vadd.f32 0.0, %v606
      %608 = vmatmul.bf16.gmra.mxu0 %v563
      %v609 = vpop.f32.mrf.mxu0
      %v610 = vadd.f32 0.0, %v609
      %v611 = vpop.f32.mrf.mxu0
      %v612 = vadd.f32 0.0, %v611
      %613 = vmatmul.bf16.gmra.mxu0 %v566
      %v614 = vpop.f32.mrf.mxu0
      %v615 = vadd.f32 0.0, %v614
      %v616 = vpop.f32.mrf.mxu0
      %v617 = vadd.f32 0.0, %v616
      %618 = vmatmul.bf16.gmra.mxu0 %v569
      %v619 = vpop.f32.mrf.mxu0
      %v620 = vadd.f32 0.0, %v619
      %v621 = vpop.f32.mrf.mxu0
      %v622 = vadd.f32 0.0, %v621
      %623 = vdwg.mxu0
      %624 = vxpose.xlu0.c.b16.start [1/8] %v519, 128
      %625 = vxpose.xlu0.c.b16.cont [2/8] 0, 128
      %626 = vxpose.xlu0.c.b16.cont [3/8] 0, 128
      %627 = vxpose.xlu0.c.b16.cont [4/8] 0, 128
      %628 = vxpose.xlu0.c.b16.cont [5/8] 0, 128
      %629 = vxpose.xlu0.c.b16.cont [6/8] 0, 128
      %630 = vxpose.xlu0.c.b16.cont [7/8] 0, 128
      %631 = vxpose.xlu0.c.b16.end [8/8] 0, 128
      %v632 = vpop.trf.xlu0
      %v633 = vpop.trf.xlu0
      %v634 = vpop.trf.xlu0
      %v635 = vpop.trf.xlu0
      %v636 = vpop.trf.xlu0
      %v637 = vpop.trf.xlu0
      %v638 = vpop.trf.xlu0
      %v639 = vpop.trf.xlu0
      %v641 = vsel %vm546, %v632, 0
      %v644 = vsel %vm546, %v633, 0
      %v647 = vsel %vm546, %v634, 0
      %v650 = vsel %vm546, %v635, 0
      %v653 = vsel %vm546, %v636, 0
      %v656 = vsel %vm546, %v637, 0
      %v659 = vsel %vm546, %v638, 0
      %v662 = vsel %vm546, %v639, 0
      %v665 = vsel %vm571, %v523, 0
      %667 = vmatpush.bf16.msra.mxu0 0
      %668 = vmatpush.bf16.msra.mxu0 0
      %669 = vmatpush.bf16.msra.mxu0 0
      %670 = vmatpush.bf16.msra.mxu0 0
      %671 = vmatpush.bf16.msra.mxu0 0
      %672 = vmatpush.bf16.msra.mxu0 0
      %673 = vmatpush.bf16.msra.mxu0 0
      %674 = vmatpush.bf16.msra.mxu0 %v665
      %675 = vmatmul.bf16.gmra.mxu0 %v641
      %v676 = vpop.f32.mrf.mxu0
      %v677 = vadd.f32 0.0, %v676
      %v678 = vpop.f32.mrf.mxu0
      %v679 = vadd.f32 0.0, %v678
      %680 = vmatmul.bf16.gmra.mxu0 %v644
      %v681 = vpop.f32.mrf.mxu0
      %v682 = vadd.f32 0.0, %v681
      %v683 = vpop.f32.mrf.mxu0
      %v684 = vadd.f32 0.0, %v683
      %685 = vmatmul.bf16.gmra.mxu0 %v647
      %v686 = vpop.f32.mrf.mxu0
      %v687 = vadd.f32 0.0, %v686
      %v688 = vpop.f32.mrf.mxu0
      %v689 = vadd.f32 0.0, %v688
      %690 = vmatmul.bf16.gmra.mxu0 %v650
      %v691 = vpop.f32.mrf.mxu0
      %v692 = vadd.f32 0.0, %v691
      %v693 = vpop.f32.mrf.mxu0
      %v694 = vadd.f32 0.0, %v693
      %695 = vmatmul.bf16.gmra.mxu0 %v653
      %v696 = vpop.f32.mrf.mxu0
      %v697 = vadd.f32 0.0, %v696
      %v698 = vpop.f32.mrf.mxu0
      %v699 = vadd.f32 0.0, %v698
      %700 = vmatmul.bf16.gmra.mxu0 %v656
      %v701 = vpop.f32.mrf.mxu0
      %v702 = vadd.f32 0.0, %v701
      %v703 = vpop.f32.mrf.mxu0
      %v704 = vadd.f32 0.0, %v703
      %705 = vmatmul.bf16.gmra.mxu0 %v659
      %v706 = vpop.f32.mrf.mxu0
      %v707 = vadd.f32 0.0, %v706
      %v708 = vpop.f32.mrf.mxu0
      %v709 = vadd.f32 0.0, %v708
      %710 = vmatmul.bf16.gmra.mxu0 %v662
      %v711 = vpop.f32.mrf.mxu0
      %v712 = vadd.f32 0.0, %v711
      %v713 = vpop.f32.mrf.mxu0
      %v714 = vadd.f32 0.0, %v713
      %715 = vdwg.mxu0
      %716 = vxpose.xlu0.c.b16.start [1/8] %v520, 128
      %717 = vxpose.xlu0.c.b16.cont [2/8] 0, 128
      %718 = vxpose.xlu0.c.b16.cont [3/8] 0, 128
      %719 = vxpose.xlu0.c.b16.cont [4/8] 0, 128
      %720 = vxpose.xlu0.c.b16.cont [5/8] 0, 128
      %721 = vxpose.xlu0.c.b16.cont [6/8] 0, 128
      %722 = vxpose.xlu0.c.b16.cont [7/8] 0, 128
      %723 = vxpose.xlu0.c.b16.end [8/8] 0, 128
      %v724 = vpop.trf.xlu0
      %v725 = vpop.trf.xlu0
      %v726 = vpop.trf.xlu0
      %v727 = vpop.trf.xlu0
      %v728 = vpop.trf.xlu0
      %v729 = vpop.trf.xlu0
      %v730 = vpop.trf.xlu0
      %v731 = vpop.trf.xlu0
      %v733 = vsel %vm546, %v724, 0
      %v736 = vsel %vm546, %v725, 0
      %v739 = vsel %vm546, %v726, 0
      %v742 = vsel %vm546, %v727, 0
      %v745 = vsel %vm546, %v728, 0
      %v748 = vsel %vm546, %v729, 0
      %v751 = vsel %vm546, %v730, 0
      %v754 = vsel %vm546, %v731, 0
      %v757 = vsel %vm571, %v524, 0
      %759 = vmatpush.bf16.msra.mxu0 0
      %760 = vmatpush.bf16.msra.mxu0 0
      %761 = vmatpush.bf16.msra.mxu0 0
      %762 = vmatpush.bf16.msra.mxu0 0
      %763 = vmatpush.bf16.msra.mxu0 0
      %764 = vmatpush.bf16.msra.mxu0 0
      %765 = vmatpush.bf16.msra.mxu0 0
      %766 = vmatpush.bf16.msra.mxu0 %v757
      %767 = vmatmul.bf16.gmra.mxu0 %v733
      %v768 = vpop.f32.mrf.mxu0
      %v769 = vadd.f32 0.0, %v768
      %v770 = vpop.f32.mrf.mxu0
      %v771 = vadd.f32 0.0, %v770
      %772 = vmatmul.bf16.gmra.mxu0 %v736
      %v773 = vpop.f32.mrf.mxu0
      %v774 = vadd.f32 0.0, %v773
      %v775 = vpop.f32.mrf.mxu0
      %v776 = vadd.f32 0.0, %v775
      %777 = vmatmul.bf16.gmra.mxu0 %v739
      %v778 = vpop.f32.mrf.mxu0
      %v779 = vadd.f32 0.0, %v778
      %v780 = vpop.f32.mrf.mxu0
      %v781 = vadd.f32 0.0, %v780
      %782 = vmatmul.bf16.gmra.mxu0 %v742
      %v783 = vpop.f32.mrf.mxu0
      %v784 = vadd.f32 0.0, %v783
      %v785 = vpop.f32.mrf.mxu0
      %v786 = vadd.f32 0.0, %v785
      %787 = vmatmul.bf16.gmra.mxu0 %v745
      %v788 = vpop.f32.mrf.mxu0
      %v789 = vadd.f32 0.0, %v788
      %v790 = vpop.f32.mrf.mxu0
      %v791 = vadd.f32 0.0, %v790
      %792 = vmatmul.bf16.gmra.mxu0 %v748
      %v793 = vpop.f32.mrf.mxu0
      %v794 = vadd.f32 0.0, %v793
      %v795 = vpop.f32.mrf.mxu0
      %v796 = vadd.f32 0.0, %v795
      %797 = vmatmul.bf16.gmra.mxu0 %v751
      %v798 = vpop.f32.mrf.mxu0
      %v799 = vadd.f32 0.0, %v798
      %v800 = vpop.f32.mrf.mxu0
      %v801 = vadd.f32 0.0, %v800
      %802 = vmatmul.bf16.gmra.mxu0 %v754
      %v803 = vpop.f32.mrf.mxu0
      %v804 = vadd.f32 0.0, %v803
      %v805 = vpop.f32.mrf.mxu0
      %v806 = vadd.f32 0.0, %v805
      %807 = vdwg.mxu0
      %808 = vxpose.xlu0.c.b16.start [1/8] %v521, 128
      %809 = vxpose.xlu0.c.b16.cont [2/8] 0, 128
      %810 = vxpose.xlu0.c.b16.cont [3/8] 0, 128
      %811 = vxpose.xlu0.c.b16.cont [4/8] 0, 128
      %812 = vxpose.xlu0.c.b16.cont [5/8] 0, 128
      %813 = vxpose.xlu0.c.b16.cont [6/8] 0, 128
      %814 = vxpose.xlu0.c.b16.cont [7/8] 0, 128
      %815 = vxpose.xlu0.c.b16.end [8/8] 0, 128
      %v816 = vpop.trf.xlu0
      %v817 = vpop.trf.xlu0
      %v818 = vpop.trf.xlu0
      %v819 = vpop.trf.xlu0
      %v820 = vpop.trf.xlu0
      %v821 = vpop.trf.xlu0
      %v822 = vpop.trf.xlu0
      %v823 = vpop.trf.xlu0
      %v825 = vsel %vm546, %v816, 0
      %v828 = vsel %vm546, %v817, 0
      %v831 = vsel %vm546, %v818, 0
      %v834 = vsel %vm546, %v819, 0
      %v837 = vsel %vm546, %v820, 0
      %v840 = vsel %vm546, %v821, 0
      %v843 = vsel %vm546, %v822, 0
      %v846 = vsel %vm546, %v823, 0
      %v849 = vsel %vm571, %v525, 0
      %851 = vmatpush.bf16.msra.mxu0 0
      %852 = vmatpush.bf16.msra.mxu0 0
      %853 = vmatpush.bf16.msra.mxu0 0
      %854 = vmatpush.bf16.msra.mxu0 0
      %855 = vmatpush.bf16.msra.mxu0 0
      %856 = vmatpush.bf16.msra.mxu0 0
      %857 = vmatpush.bf16.msra.mxu0 0
      %858 = vmatpush.bf16.msra.mxu0 %v849
      %859 = vmatmul.bf16.gmra.mxu0 %v825
      %v860 = vpop.f32.mrf.mxu0
      %v861 = vadd.f32 0.0, %v860
      %v862 = vpop.f32.mrf.mxu0
      %v863 = vadd.f32 0.0, %v862
      %864 = vmatmul.bf16.gmra.mxu0 %v828
      %v865 = vpop.f32.mrf.mxu0
      %v866 = vadd.f32 0.0, %v865
      %v867 = vpop.f32.mrf.mxu0
      %v868 = vadd.f32 0.0, %v867
      %869 = vmatmul.bf16.gmra.mxu0 %v831
      %v870 = vpop.f32.mrf.mxu0
      %v871 = vadd.f32 0.0, %v870
      %v872 = vpop.f32.mrf.mxu0
      %v873 = vadd.f32 0.0, %v872
      %874 = vmatmul.bf16.gmra.mxu0 %v834
      %v875 = vpop.f32.mrf.mxu0
      %v876 = vadd.f32 0.0, %v875
      %v877 = vpop.f32.mrf.mxu0
      %v878 = vadd.f32 0.0, %v877
      %879 = vmatmul.bf16.gmra.mxu0 %v837
      %v880 = vpop.f32.mrf.mxu0
      %v881 = vadd.f32 0.0, %v880
      %v882 = vpop.f32.mrf.mxu0
      %v883 = vadd.f32 0.0, %v882
      %884 = vmatmul.bf16.gmra.mxu0 %v840
      %v885 = vpop.f32.mrf.mxu0
      %v886 = vadd.f32 0.0, %v885
      %v887 = vpop.f32.mrf.mxu0
      %v888 = vadd.f32 0.0, %v887
      %889 = vmatmul.bf16.gmra.mxu0 %v843
      %v890 = vpop.f32.mrf.mxu0
      %v891 = vadd.f32 0.0, %v890
      %v892 = vpop.f32.mrf.mxu0
      %v893 = vadd.f32 0.0, %v892
      %894 = vmatmul.bf16.gmra.mxu0 %v846
      %v895 = vpop.f32.mrf.mxu0
      %v896 = vadd.f32 0.0, %v895
      %v897 = vpop.f32.mrf.mxu0
      %v898 = vadd.f32 0.0, %v897
      %899 = vdwg.mxu0
      %v900 = vlaneseq
      %v901 = vand.u32 %v900, 127
      %vm902 = vcmp.lt.s32.totalorder %v901, 64
      %v903 = vsel %vm902, 1, 0
      %vm904 = vcmp.eq.s32.totalorder %v903, 1
      %v905 = vsel %vm904, %v585, -1e+30
      %v906 = vsel %vm904, %v587, -1e+30
      %v907 = vsel %vm904, %v590, -1e+30
      %v908 = vsel %vm904, %v592, -1e+30
      %v909 = vsel %vm904, %v595, -1e+30
      %v910 = vsel %vm904, %v597, -1e+30
      %v911 = vsel %vm904, %v600, -1e+30
      %v912 = vsel %vm904, %v602, -1e+30
      %v913 = vsel %vm904, %v605, -1e+30
      %v914 = vsel %vm904, %v607, -1e+30
      %v915 = vsel %vm904, %v610, -1e+30
      %v916 = vsel %vm904, %v612, -1e+30
      %v917 = vsel %vm904, %v615, -1e+30
      %v918 = vsel %vm904, %v617, -1e+30
      %v919 = vsel %vm904, %v620, -1e+30
      %v920 = vsel %vm904, %v622, -1e+30
      %v921 = vsel %vm904, %v677, -1e+30
      %v922 = vsel %vm904, %v679, -1e+30
      %v923 = vsel %vm904, %v682, -1e+30
      %v924 = vsel %vm904, %v684, -1e+30
      %v925 = vsel %vm904, %v687, -1e+30
      %v926 = vsel %vm904, %v689, -1e+30
      %v927 = vsel %vm904, %v692, -1e+30
      %v928 = vsel %vm904, %v694, -1e+30
      %v929 = vsel %vm904, %v697, -1e+30
      %v930 = vsel %vm904, %v699, -1e+30
      %v931 = vsel %vm904, %v702, -1e+30
      %v932 = vsel %vm904, %v704, -1e+30
      %v933 = vsel %vm904, %v707, -1e+30
      %v934 = vsel %vm904, %v709, -1e+30
      %v935 = vsel %vm904, %v712, -1e+30
      %v936 = vsel %vm904, %v714, -1e+30
      %v937 = vsel %vm904, %v769, -1e+30
      %v938 = vsel %vm904, %v771, -1e+30
      %v939 = vsel %vm904, %v774, -1e+30
      %v940 = vsel %vm904, %v776, -1e+30
      %v941 = vsel %vm904, %v779, -1e+30
      %v942 = vsel %vm904, %v781, -1e+30
      %v943 = vsel %vm904, %v784, -1e+30
      %v944 = vsel %vm904, %v786, -1e+30
      %v945 = vsel %vm904, %v789, -1e+30
      %v946 = vsel %vm904, %v791, -1e+30
      %v947 = vsel %vm904, %v794, -1e+30
      %v948 = vsel %vm904, %v796, -1e+30
      %v949 = vsel %vm904, %v799, -1e+30
      %v950 = vsel %vm904, %v801, -1e+30
      %v951 = vsel %vm904, %v804, -1e+30
      %v952 = vsel %vm904, %v806, -1e+30
      %v953 = vsel %vm904, %v861, -1e+30
      %v954 = vsel %vm904, %v863, -1e+30
      %v955 = vsel %vm904, %v866, -1e+30
      %v956 = vsel %vm904, %v868, -1e+30
      %v957 = vsel %vm904, %v871, -1e+30
      %v958 = vsel %vm904, %v873, -1e+30
      %v959 = vsel %vm904, %v876, -1e+30
      %v960 = vsel %vm904, %v878, -1e+30
      %v961 = vsel %vm904, %v881, -1e+30
      %v962 = vsel %vm904, %v883, -1e+30
      %v963 = vsel %vm904, %v886, -1e+30
      %v964 = vsel %vm904, %v888, -1e+30
      %v965 = vsel %vm904, %v891, -1e+30
      %v966 = vsel %vm904, %v893, -1e+30
      %v967 = vsel %vm904, %v896, -1e+30
      %v968 = vsel %vm904, %v898, -1e+30
      %969 = vmax.xlane.f32.xlu0 %v905
      %v970 = vpop.xlane.xlu0 %969
      %971 = vmax.xlane.f32.xlu0 %v906
      %v972 = vpop.xlane.xlu0 %971
      %973 = vmax.xlane.f32.xlu0 %v907
      %v974 = vpop.xlane.xlu0 %973
      %975 = vmax.xlane.f32.xlu0 %v908
      %v976 = vpop.xlane.xlu0 %975
      %977 = vmax.xlane.f32.xlu0 %v909
      %v978 = vpop.xlane.xlu0 %977
      %979 = vmax.xlane.f32.xlu0 %v910
      %v980 = vpop.xlane.xlu0 %979
      %981 = vmax.xlane.f32.xlu0 %v911
      %v982 = vpop.xlane.xlu0 %981
      %983 = vmax.xlane.f32.xlu0 %v912
      %v984 = vpop.xlane.xlu0 %983
      %985 = vmax.xlane.f32.xlu0 %v913
      %v986 = vpop.xlane.xlu0 %985
      %987 = vmax.xlane.f32.xlu0 %v914
      %v988 = vpop.xlane.xlu0 %987
      %989 = vmax.xlane.f32.xlu0 %v915
      %v990 = vpop.xlane.xlu0 %989
      %991 = vmax.xlane.f32.xlu0 %v916
      %v992 = vpop.xlane.xlu0 %991
      %993 = vmax.xlane.f32.xlu0 %v917
      %v994 = vpop.xlane.xlu0 %993
      %995 = vmax.xlane.f32.xlu0 %v918
      %v996 = vpop.xlane.xlu0 %995
      %997 = vmax.xlane.f32.xlu0 %v919
      %v998 = vpop.xlane.xlu0 %997
      %999 = vmax.xlane.f32.xlu0 %v920
      %v1000 = vpop.xlane.xlu0 %999
      %1001 = vmax.xlane.f32.xlu0 %v921
      %v1002 = vpop.xlane.xlu0 %1001
      %1003 = vmax.xlane.f32.xlu0 %v922
      %v1004 = vpop.xlane.xlu0 %1003
      %1005 = vmax.xlane.f32.xlu0 %v923
      %v1006 = vpop.xlane.xlu0 %1005
      %1007 = vmax.xlane.f32.xlu0 %v924
      %v1008 = vpop.xlane.xlu0 %1007
      %1009 = vmax.xlane.f32.xlu0 %v925
      %v1010 = vpop.xlane.xlu0 %1009
      %1011 = vmax.xlane.f32.xlu0 %v926
      %v1012 = vpop.xlane.xlu0 %1011
      %1013 = vmax.xlane.f32.xlu0 %v927
      %v1014 = vpop.xlane.xlu0 %1013
      %1015 = vmax.xlane.f32.xlu0 %v928
      %v1016 = vpop.xlane.xlu0 %1015
      %1017 = vmax.xlane.f32.xlu0 %v929
      %v1018 = vpop.xlane.xlu0 %1017
      %1019 = vmax.xlane.f32.xlu0 %v930
      %v1020 = vpop.xlane.xlu0 %1019
      %1021 = vmax.xlane.f32.xlu0 %v931
      %v1022 = vpop.xlane.xlu0 %1021
      %1023 = vmax.xlane.f32.xlu0 %v932
      %v1024 = vpop.xlane.xlu0 %1023
      %1025 = vmax.xlane.f32.xlu0 %v933
      %v1026 = vpop.xlane.xlu0 %1025
      %1027 = vmax.xlane.f32.xlu0 %v934
      %v1028 = vpop.xlane.xlu0 %1027
      %1029 = vmax.xlane.f32.xlu0 %v935
      %v1030 = vpop.xlane.xlu0 %1029
      %1031 = vmax.xlane.f32.xlu0 %v936
      %v1032 = vpop.xlane.xlu0 %1031
      %1033 = vmax.xlane.f32.xlu0 %v937
      %v1034 = vpop.xlane.xlu0 %1033
      %1035 = vmax.xlane.f32.xlu0 %v938
      %v1036 = vpop.xlane.xlu0 %1035
      %1037 = vmax.xlane.f32.xlu0 %v939
      %v1038 = vpop.xlane.xlu0 %1037
      %1039 = vmax.xlane.f32.xlu0 %v940
      %v1040 = vpop.xlane.xlu0 %1039
      %1041 = vmax.xlane.f32.xlu0 %v941
      %v1042 = vpop.xlane.xlu0 %1041
      %1043 = vmax.xlane.f32.xlu0 %v942
      %v1044 = vpop.xlane.xlu0 %1043
      %1045 = vmax.xlane.f32.xlu0 %v943
      %v1046 = vpop.xlane.xlu0 %1045
      %1047 = vmax.xlane.f32.xlu0 %v944
      %v1048 = vpop.xlane.xlu0 %1047
      %1049 = vmax.xlane.f32.xlu0 %v945
      %v1050 = vpop.xlane.xlu0 %1049
      %1051 = vmax.xlane.f32.xlu0 %v946
      %v1052 = vpop.xlane.xlu0 %1051
      %1053 = vmax.xlane.f32.xlu0 %v947
      %v1054 = vpop.xlane.xlu0 %1053
      %1055 = vmax.xlane.f32.xlu0 %v948
      %v1056 = vpop.xlane.xlu0 %1055
      %1057 = vmax.xlane.f32.xlu0 %v949
      %v1058 = vpop.xlane.xlu0 %1057
      %1059 = vmax.xlane.f32.xlu0 %v950
      %v1060 = vpop.xlane.xlu0 %1059
      %1061 = vmax.xlane.f32.xlu0 %v951
      %v1062 = vpop.xlane.xlu0 %1061
      %1063 = vmax.xlane.f32.xlu0 %v952
      %v1064 = vpop.xlane.xlu0 %1063
      %1065 = vmax.xlane.f32.xlu0 %v953
      %v1066 = vpop.xlane.xlu0 %1065
      %1067 = vmax.xlane.f32.xlu0 %v954
      %v1068 = vpop.xlane.xlu0 %1067
      %1069 = vmax.xlane.f32.xlu0 %v955
      %v1070 = vpop.xlane.xlu0 %1069
      %1071 = vmax.xlane.f32.xlu0 %v956
      %v1072 = vpop.xlane.xlu0 %1071
      %1073 = vmax.xlane.f32.xlu0 %v957
      %v1074 = vpop.xlane.xlu0 %1073
      %1075 = vmax.xlane.f32.xlu0 %v958
      %v1076 = vpop.xlane.xlu0 %1075
      %1077 = vmax.xlane.f32.xlu0 %v959
      %v1078 = vpop.xlane.xlu0 %1077
      %1079 = vmax.xlane.f32.xlu0 %v960
      %v1080 = vpop.xlane.xlu0 %1079
      %1081 = vmax.xlane.f32.xlu0 %v961
      %v1082 = vpop.xlane.xlu0 %1081
      %1083 = vmax.xlane.f32.xlu0 %v962
      %v1084 = vpop.xlane.xlu0 %1083
      %1085 = vmax.xlane.f32.xlu0 %v963
      %v1086 = vpop.xlane.xlu0 %1085
      %1087 = vmax.xlane.f32.xlu0 %v964
      %v1088 = vpop.xlane.xlu0 %1087
      %1089 = vmax.xlane.f32.xlu0 %v965
      %v1090 = vpop.xlane.xlu0 %1089
      %1091 = vmax.xlane.f32.xlu0 %v966
      %v1092 = vpop.xlane.xlu0 %1091
      %1093 = vmax.xlane.f32.xlu0 %v967
      %v1094 = vpop.xlane.xlu0 %1093
      %1095 = vmax.xlane.f32.xlu0 %v968
      %v1096 = vpop.xlane.xlu0 %1095
      %v1097 = vsub.f32 %v905, %v970
      %v1098 = vsub.f32 %v906, %v972
      %v1099 = vsub.f32 %v907, %v974
      %v1100 = vsub.f32 %v908, %v976
      %v1101 = vsub.f32 %v909, %v978
      %v1102 = vsub.f32 %v910, %v980
      %v1103 = vsub.f32 %v911, %v982
      %v1104 = vsub.f32 %v912, %v984
      %v1105 = vsub.f32 %v913, %v986
      %v1106 = vsub.f32 %v914, %v988
      %v1107 = vsub.f32 %v915, %v990
      %v1108 = vsub.f32 %v916, %v992
      %v1109 = vsub.f32 %v917, %v994
      %v1110 = vsub.f32 %v918, %v996
      %v1111 = vsub.f32 %v919, %v998
      %v1112 = vsub.f32 %v920, %v1000
      %v1113 = vsub.f32 %v921, %v1002
      %v1114 = vsub.f32 %v922, %v1004
      %v1115 = vsub.f32 %v923, %v1006
      %v1116 = vsub.f32 %v924, %v1008
      %v1117 = vsub.f32 %v925, %v1010
      %v1118 = vsub.f32 %v926, %v1012
      %v1119 = vsub.f32 %v927, %v1014
      %v1120 = vsub.f32 %v928, %v1016
      %v1121 = vsub.f32 %v929, %v1018
      %v1122 = vsub.f32 %v930, %v1020
      %v1123 = vsub.f32 %v931, %v1022
      %v1124 = vsub.f32 %v932, %v1024
      %v1125 = vsub.f32 %v933, %v1026
      %v1126 = vsub.f32 %v934, %v1028
      %v1127 = vsub.f32 %v935, %v1030
      %v1128 = vsub.f32 %v936, %v1032
      %v1129 = vsub.f32 %v937, %v1034
      %v1130 = vsub.f32 %v938, %v1036
      %v1131 = vsub.f32 %v939, %v1038
      %v1132 = vsub.f32 %v940, %v1040
      %v1133 = vsub.f32 %v941, %v1042
      %v1134 = vsub.f32 %v942, %v1044
      %v1135 = vsub.f32 %v943, %v1046
      %v1136 = vsub.f32 %v944, %v1048
      %v1137 = vsub.f32 %v945, %v1050
      %v1138 = vsub.f32 %v946, %v1052
      %v1139 = vsub.f32 %v947, %v1054
      %v1140 = vsub.f32 %v948, %v1056
      %v1141 = vsub.f32 %v949, %v1058
      %v1142 = vsub.f32 %v950, %v1060
      %v1143 = vsub.f32 %v951, %v1062
      %v1144 = vsub.f32 %v952, %v1064
      %v1145 = vsub.f32 %v953, %v1066
      %v1146 = vsub.f32 %v954, %v1068
      %v1147 = vsub.f32 %v955, %v1070
      %v1148 = vsub.f32 %v956, %v1072
      %v1149 = vsub.f32 %v957, %v1074
      %v1150 = vsub.f32 %v958, %v1076
      %v1151 = vsub.f32 %v959, %v1078
      %v1152 = vsub.f32 %v960, %v1080
      %v1153 = vsub.f32 %v961, %v1082
      %v1154 = vsub.f32 %v962, %v1084
      %v1155 = vsub.f32 %v963, %v1086
      %v1156 = vsub.f32 %v964, %v1088
      %v1157 = vsub.f32 %v965, %v1090
      %v1158 = vsub.f32 %v966, %v1092
      %v1159 = vsub.f32 %v967, %v1094
      %v1160 = vsub.f32 %v968, %v1096
      %v1161 = vmul.f32 %v1097, 1.442695
      %v1162 = vpow.pop %v1161
      %v1163 = vmul.f32 %v1098, 1.442695
      %v1164 = vpow.pop %v1163
      %v1165 = vmul.f32 %v1099, 1.442695
      %v1166 = vpow.pop %v1165
      %v1167 = vmul.f32 %v1100, 1.442695
      %v1168 = vpow.pop %v1167
      %v1169 = vmul.f32 %v1101, 1.442695
      %v1170 = vpow.pop %v1169
      %v1171 = vmul.f32 %v1102, 1.442695
      %v1172 = vpow.pop %v1171
      %v1173 = vmul.f32 %v1103, 1.442695
      %v1174 = vpow.pop %v1173
      %v1175 = vmul.f32 %v1104, 1.442695
      %v1176 = vpow.pop %v1175
      %v1177 = vmul.f32 %v1105, 1.442695
      %v1178 = vpow.pop %v1177
      %v1179 = vmul.f32 %v1106, 1.442695
      %v1180 = vpow.pop %v1179
      %v1181 = vmul.f32 %v1107, 1.442695
      %v1182 = vpow.pop %v1181
      %v1183 = vmul.f32 %v1108, 1.442695
      %v1184 = vpow.pop %v1183
      %v1185 = vmul.f32 %v1109, 1.442695
      %v1186 = vpow.pop %v1185
      %v1187 = vmul.f32 %v1110, 1.442695
      %v1188 = vpow.pop %v1187
      %v1189 = vmul.f32 %v1111, 1.442695
      %v1190 = vpow.pop %v1189
      %v1191 = vmul.f32 %v1112, 1.442695
      %v1192 = vpow.pop %v1191
      %v1193 = vmul.f32 %v1113, 1.442695
      %v1194 = vpow.pop %v1193
      %v1195 = vmul.f32 %v1114, 1.442695
      %v1196 = vpow.pop %v1195
      %v1197 = vmul.f32 %v1115, 1.442695
      %v1198 = vpow.pop %v1197
      %v1199 = vmul.f32 %v1116, 1.442695
      %v1200 = vpow.pop %v1199
      %v1201 = vmul.f32 %v1117, 1.442695
      %v1202 = vpow.pop %v1201
      %v1203 = vmul.f32 %v1118, 1.442695
      %v1204 = vpow.pop %v1203
      %v1205 = vmul.f32 %v1119, 1.442695
      %v1206 = vpow.pop %v1205
      %v1207 = vmul.f32 %v1120, 1.442695
      %v1208 = vpow.pop %v1207
      %v1209 = vmul.f32 %v1121, 1.442695
      %v1210 = vpow.pop %v1209
      %v1211 = vmul.f32 %v1122, 1.442695
      %v1212 = vpow.pop %v1211
      %v1213 = vmul.f32 %v1123, 1.442695
      %v1214 = vpow.pop %v1213
      %v1215 = vmul.f32 %v1124, 1.442695
      %v1216 = vpow.pop %v1215
      %v1217 = vmul.f32 %v1125, 1.442695
      %v1218 = vpow.pop %v1217
      %v1219 = vmul.f32 %v1126, 1.442695
      %v1220 = vpow.pop %v1219
      %v1221 = vmul.f32 %v1127, 1.442695
      %v1222 = vpow.pop %v1221
      %v1223 = vmul.f32 %v1128, 1.442695
      %v1224 = vpow.pop %v1223
      %v1225 = vmul.f32 %v1129, 1.442695
      %v1226 = vpow.pop %v1225
      %v1227 = vmul.f32 %v1130, 1.442695
      %v1228 = vpow.pop %v1227
      %v1229 = vmul.f32 %v1131, 1.442695
      %v1230 = vpow.pop %v1229
      %v1231 = vmul.f32 %v1132, 1.442695
      %v1232 = vpow.pop %v1231
      %v1233 = vmul.f32 %v1133, 1.442695
      %v1234 = vpow.pop %v1233
      %v1235 = vmul.f32 %v1134, 1.442695
      %v1236 = vpow.pop %v1235
      %v1237 = vmul.f32 %v1135, 1.442695
      %v1238 = vpow.pop %v1237
      %v1239 = vmul.f32 %v1136, 1.442695
      %v1240 = vpow.pop %v1239
      %v1241 = vmul.f32 %v1137, 1.442695
      %v1242 = vpow.pop %v1241
      %v1243 = vmul.f32 %v1138, 1.442695
      %v1244 = vpow.pop %v1243
      %v1245 = vmul.f32 %v1139, 1.442695
      %v1246 = vpow.pop %v1245
      %v1247 = vmul.f32 %v1140, 1.442695
      %v1248 = vpow.pop %v1247
      %v1249 = vmul.f32 %v1141, 1.442695
      %v1250 = vpow.pop %v1249
      %v1251 = vmul.f32 %v1142, 1.442695
      %v1252 = vpow.pop %v1251
      %v1253 = vmul.f32 %v1143, 1.442695
      %v1254 = vpow.pop %v1253
      %v1255 = vmul.f32 %v1144, 1.442695
      %v1256 = vpow.pop %v1255
      %v1257 = vmul.f32 %v1145, 1.442695
      %v1258 = vpow.pop %v1257
      %v1259 = vmul.f32 %v1146, 1.442695
      %v1260 = vpow.pop %v1259
      %v1261 = vmul.f32 %v1147, 1.442695
      %v1262 = vpow.pop %v1261
      %v1263 = vmul.f32 %v1148, 1.442695
      %v1264 = vpow.pop %v1263
      %v1265 = vmul.f32 %v1149, 1.442695
      %v1266 = vpow.pop %v1265
      %v1267 = vmul.f32 %v1150, 1.442695
      %v1268 = vpow.pop %v1267
      %v1269 = vmul.f32 %v1151, 1.442695
      %v1270 = vpow.pop %v1269
      %v1271 = vmul.f32 %v1152, 1.442695
      %v1272 = vpow.pop %v1271
      %v1273 = vmul.f32 %v1153, 1.442695
      %v1274 = vpow.pop %v1273
      %v1275 = vmul.f32 %v1154, 1.442695
      %v1276 = vpow.pop %v1275
      %v1277 = vmul.f32 %v1155, 1.442695
      %v1278 = vpow.pop %v1277
      %v1279 = vmul.f32 %v1156, 1.442695
      %v1280 = vpow.pop %v1279
      %v1281 = vmul.f32 %v1157, 1.442695
      %v1282 = vpow.pop %v1281
      %v1283 = vmul.f32 %v1158, 1.442695
      %v1284 = vpow.pop %v1283
      %v1285 = vmul.f32 %v1159, 1.442695
      %v1286 = vpow.pop %v1285
      %v1287 = vmul.f32 %v1160, 1.442695
      %v1288 = vpow.pop %v1287
      %1289 = vadd.xlane.f32.xlu0 %v1162
      %v1290 = vpop.xlane.xlu0 %1289
      %1291 = vadd.xlane.f32.xlu0 %v1164
      %v1292 = vpop.xlane.xlu0 %1291
      %1293 = vadd.xlane.f32.xlu0 %v1166
      %v1294 = vpop.xlane.xlu0 %1293
      %1295 = vadd.xlane.f32.xlu0 %v1168
      %v1296 = vpop.xlane.xlu0 %1295
      %1297 = vadd.xlane.f32.xlu0 %v1170
      %v1298 = vpop.xlane.xlu0 %1297
      %1299 = vadd.xlane.f32.xlu0 %v1172
      %v1300 = vpop.xlane.xlu0 %1299
      %1301 = vadd.xlane.f32.xlu0 %v1174
      %v1302 = vpop.xlane.xlu0 %1301
      %1303 = vadd.xlane.f32.xlu0 %v1176
      %v1304 = vpop.xlane.xlu0 %1303
      %1305 = vadd.xlane.f32.xlu0 %v1178
      %v1306 = vpop.xlane.xlu0 %1305
      %1307 = vadd.xlane.f32.xlu0 %v1180
      %v1308 = vpop.xlane.xlu0 %1307
      %1309 = vadd.xlane.f32.xlu0 %v1182
      %v1310 = vpop.xlane.xlu0 %1309
      %1311 = vadd.xlane.f32.xlu0 %v1184
      %v1312 = vpop.xlane.xlu0 %1311
      %1313 = vadd.xlane.f32.xlu0 %v1186
      %v1314 = vpop.xlane.xlu0 %1313
      %1315 = vadd.xlane.f32.xlu0 %v1188
      %v1316 = vpop.xlane.xlu0 %1315
      %1317 = vadd.xlane.f32.xlu0 %v1190
      %v1318 = vpop.xlane.xlu0 %1317
      %1319 = vadd.xlane.f32.xlu0 %v1192
      %v1320 = vpop.xlane.xlu0 %1319
      %1321 = vadd.xlane.f32.xlu0 %v1194
      %v1322 = vpop.xlane.xlu0 %1321
      %1323 = vadd.xlane.f32.xlu0 %v1196
      %v1324 = vpop.xlane.xlu0 %1323
      %1325 = vadd.xlane.f32.xlu0 %v1198
      %v1326 = vpop.xlane.xlu0 %1325
      %1327 = vadd.xlane.f32.xlu0 %v1200
      %v1328 = vpop.xlane.xlu0 %1327
      %1329 = vadd.xlane.f32.xlu0 %v1202
      %v1330 = vpop.xlane.xlu0 %1329
      %1331 = vadd.xlane.f32.xlu0 %v1204
      %v1332 = vpop.xlane.xlu0 %1331
      %1333 = vadd.xlane.f32.xlu0 %v1206
      %v1334 = vpop.xlane.xlu0 %1333
      %1335 = vadd.xlane.f32.xlu0 %v1208
      %v1336 = vpop.xlane.xlu0 %1335
      %1337 = vadd.xlane.f32.xlu0 %v1210
      %v1338 = vpop.xlane.xlu0 %1337
      %1339 = vadd.xlane.f32.xlu0 %v1212
      %v1340 = vpop.xlane.xlu0 %1339
      %1341 = vadd.xlane.f32.xlu0 %v1214
      %v1342 = vpop.xlane.xlu0 %1341
      %1343 = vadd.xlane.f32.xlu0 %v1216
      %v1344 = vpop.xlane.xlu0 %1343
      %1345 = vadd.xlane.f32.xlu0 %v1218
      %v1346 = vpop.xlane.xlu0 %1345
      %1347 = vadd.xlane.f32.xlu0 %v1220
      %v1348 = vpop.xlane.xlu0 %1347
      %1349 = vadd.xlane.f32.xlu0 %v1222
      %v1350 = vpop.xlane.xlu0 %1349
      %1351 = vadd.xlane.f32.xlu0 %v1224
      %v1352 = vpop.xlane.xlu0 %1351
      %1353 = vadd.xlane.f32.xlu0 %v1226
      %v1354 = vpop.xlane.xlu0 %1353
      %1355 = vadd.xlane.f32.xlu0 %v1228
      %v1356 = vpop.xlane.xlu0 %1355
      %1357 = vadd.xlane.f32.xlu0 %v1230
      %v1358 = vpop.xlane.xlu0 %1357
      %1359 = vadd.xlane.f32.xlu0 %v1232
      %v1360 = vpop.xlane.xlu0 %1359
      %1361 = vadd.xlane.f32.xlu0 %v1234
      %v1362 = vpop.xlane.xlu0 %1361
      %1363 = vadd.xlane.f32.xlu0 %v1236
      %v1364 = vpop.xlane.xlu0 %1363
      %1365 = vadd.xlane.f32.xlu0 %v1238
      %v1366 = vpop.xlane.xlu0 %1365
      %1367 = vadd.xlane.f32.xlu0 %v1240
      %v1368 = vpop.xlane.xlu0 %1367
      %1369 = vadd.xlane.f32.xlu0 %v1242
      %v1370 = vpop.xlane.xlu0 %1369
      %1371 = vadd.xlane.f32.xlu0 %v1244
      %v1372 = vpop.xlane.xlu0 %1371
      %1373 = vadd.xlane.f32.xlu0 %v1246
      %v1374 = vpop.xlane.xlu0 %1373
      %1375 = vadd.xlane.f32.xlu0 %v1248
      %v1376 = vpop.xlane.xlu0 %1375
      %1377 = vadd.xlane.f32.xlu0 %v1250
      %v1378 = vpop.xlane.xlu0 %1377
      %1379 = vadd.xlane.f32.xlu0 %v1252
      %v1380 = vpop.xlane.xlu0 %1379
      %1381 = vadd.xlane.f32.xlu0 %v1254
      %v1382 = vpop.xlane.xlu0 %1381
      %1383 = vadd.xlane.f32.xlu0 %v1256
      %v1384 = vpop.xlane.xlu0 %1383
      %1385 = vadd.xlane.f32.xlu0 %v1258
      %v1386 = vpop.xlane.xlu0 %1385
      %1387 = vadd.xlane.f32.xlu0 %v1260
      %v1388 = vpop.xlane.xlu0 %1387
      %1389 = vadd.xlane.f32.xlu0 %v1262
      %v1390 = vpop.xlane.xlu0 %1389
      %1391 = vadd.xlane.f32.xlu0 %v1264
      %v1392 = vpop.xlane.xlu0 %1391
      %1393 = vadd.xlane.f32.xlu0 %v1266
      %v1394 = vpop.xlane.xlu0 %1393
      %1395 = vadd.xlane.f32.xlu0 %v1268
      %v1396 = vpop.xlane.xlu0 %1395
      %1397 = vadd.xlane.f32.xlu0 %v1270
      %v1398 = vpop.xlane.xlu0 %1397
      %1399 = vadd.xlane.f32.xlu0 %v1272
      %v1400 = vpop.xlane.xlu0 %1399
      %1401 = vadd.xlane.f32.xlu0 %v1274
      %v1402 = vpop.xlane.xlu0 %1401
      %1403 = vadd.xlane.f32.xlu0 %v1276
      %v1404 = vpop.xlane.xlu0 %1403
      %1405 = vadd.xlane.f32.xlu0 %v1278
      %v1406 = vpop.xlane.xlu0 %1405
      %1407 = vadd.xlane.f32.xlu0 %v1280
      %v1408 = vpop.xlane.xlu0 %1407
      %1409 = vadd.xlane.f32.xlu0 %v1282
      %v1410 = vpop.xlane.xlu0 %1409
      %1411 = vadd.xlane.f32.xlu0 %v1284
      %v1412 = vpop.xlane.xlu0 %1411
      %1413 = vadd.xlane.f32.xlu0 %v1286
      %v1414 = vpop.xlane.xlu0 %1413
      %1415 = vadd.xlane.f32.xlu0 %v1288
      %v1416 = vpop.xlane.xlu0 %1415
      %v1417 = vrcp.pop %v1290
      %v1418 = vrcp.pop %v1292
      %v1419 = vrcp.pop %v1294
      %v1420 = vrcp.pop %v1296
      %v1421 = vrcp.pop %v1298
      %v1422 = vrcp.pop %v1300
      %v1423 = vrcp.pop %v1302
      %v1424 = vrcp.pop %v1304
      %v1425 = vrcp.pop %v1306
      %v1426 = vrcp.pop %v1308
      %v1427 = vrcp.pop %v1310
      %v1428 = vrcp.pop %v1312
      %v1429 = vrcp.pop %v1314
      %v1430 = vrcp.pop %v1316
      %v1431 = vrcp.pop %v1318
      %v1432 = vrcp.pop %v1320
      %v1433 = vrcp.pop %v1322
      %v1434 = vrcp.pop %v1324
      %v1435 = vrcp.pop %v1326
      %v1436 = vrcp.pop %v1328
      %v1437 = vrcp.pop %v1330
      %v1438 = vrcp.pop %v1332
      %v1439 = vrcp.pop %v1334
      %v1440 = vrcp.pop %v1336
      %v1441 = vrcp.pop %v1338
      %v1442 = vrcp.pop %v1340
      %v1443 = vrcp.pop %v1342
      %v1444 = vrcp.pop %v1344
      %v1445 = vrcp.pop %v1346
      %v1446 = vrcp.pop %v1348
      %v1447 = vrcp.pop %v1350
      %v1448 = vrcp.pop %v1352
      %v1449 = vrcp.pop %v1354
      %v1450 = vrcp.pop %v1356
      %v1451 = vrcp.pop %v1358
      %v1452 = vrcp.pop %v1360
      %v1453 = vrcp.pop %v1362
      %v1454 = vrcp.pop %v1364
      %v1455 = vrcp.pop %v1366
      %v1456 = vrcp.pop %v1368
      %v1457 = vrcp.pop %v1370
      %v1458 = vrcp.pop %v1372
      %v1459 = vrcp.pop %v1374
      %v1460 = vrcp.pop %v1376
      %v1461 = vrcp.pop %v1378
      %v1462 = vrcp.pop %v1380
      %v1463 = vrcp.pop %v1382
      %v1464 = vrcp.pop %v1384
      %v1465 = vrcp.pop %v1386
      %v1466 = vrcp.pop %v1388
      %v1467 = vrcp.pop %v1390
      %v1468 = vrcp.pop %v1392
      %v1469 = vrcp.pop %v1394
      %v1470 = vrcp.pop %v1396
      %v1471 = vrcp.pop %v1398
      %v1472 = vrcp.pop %v1400
      %v1473 = vrcp.pop %v1402
      %v1474 = vrcp.pop %v1404
      %v1475 = vrcp.pop %v1406
      %v1476 = vrcp.pop %v1408
      %v1477 = vrcp.pop %v1410
      %v1478 = vrcp.pop %v1412
      %v1479 = vrcp.pop %v1414
      %v1480 = vrcp.pop %v1416
      %v1481 = vmul.f32 %v1162, %v1417
      %v1482 = vmul.f32 %v1164, %v1418
      %v1483 = vmul.f32 %v1166, %v1419
      %v1484 = vmul.f32 %v1168, %v1420
      %v1485 = vmul.f32 %v1170, %v1421
      %v1486 = vmul.f32 %v1172, %v1422
      %v1487 = vmul.f32 %v1174, %v1423
      %v1488 = vmul.f32 %v1176, %v1424
      %v1489 = vmul.f32 %v1178, %v1425
      %v1490 = vmul.f32 %v1180, %v1426
      %v1491 = vmul.f32 %v1182, %v1427
      %v1492 = vmul.f32 %v1184, %v1428
      %v1493 = vmul.f32 %v1186, %v1429
      %v1494 = vmul.f32 %v1188, %v1430
      %v1495 = vmul.f32 %v1190, %v1431
      %v1496 = vmul.f32 %v1192, %v1432
      %v1497 = vmul.f32 %v1194, %v1433
      %v1498 = vmul.f32 %v1196, %v1434
      %v1499 = vmul.f32 %v1198, %v1435
      %v1500 = vmul.f32 %v1200, %v1436
      %v1501 = vmul.f32 %v1202, %v1437
      %v1502 = vmul.f32 %v1204, %v1438
      %v1503 = vmul.f32 %v1206, %v1439
      %v1504 = vmul.f32 %v1208, %v1440
      %v1505 = vmul.f32 %v1210, %v1441
      %v1506 = vmul.f32 %v1212, %v1442
      %v1507 = vmul.f32 %v1214, %v1443
      %v1508 = vmul.f32 %v1216, %v1444
      %v1509 = vmul.f32 %v1218, %v1445
      %v1510 = vmul.f32 %v1220, %v1446
      %v1511 = vmul.f32 %v1222, %v1447
      %v1512 = vmul.f32 %v1224, %v1448
      %v1513 = vmul.f32 %v1226, %v1449
      %v1514 = vmul.f32 %v1228, %v1450
      %v1515 = vmul.f32 %v1230, %v1451
      %v1516 = vmul.f32 %v1232, %v1452
      %v1517 = vmul.f32 %v1234, %v1453
      %v1518 = vmul.f32 %v1236, %v1454
      %v1519 = vmul.f32 %v1238, %v1455
      %v1520 = vmul.f32 %v1240, %v1456
      %v1521 = vmul.f32 %v1242, %v1457
      %v1522 = vmul.f32 %v1244, %v1458
      %v1523 = vmul.f32 %v1246, %v1459
      %v1524 = vmul.f32 %v1248, %v1460
      %v1525 = vmul.f32 %v1250, %v1461
      %v1526 = vmul.f32 %v1252, %v1462
      %v1527 = vmul.f32 %v1254, %v1463
      %v1528 = vmul.f32 %v1256, %v1464
      %v1529 = vmul.f32 %v1258, %v1465
      %v1530 = vmul.f32 %v1260, %v1466
      %v1531 = vmul.f32 %v1262, %v1467
      %v1532 = vmul.f32 %v1264, %v1468
      %v1533 = vmul.f32 %v1266, %v1469
      %v1534 = vmul.f32 %v1268, %v1470
      %v1535 = vmul.f32 %v1270, %v1471
      %v1536 = vmul.f32 %v1272, %v1472
      %v1537 = vmul.f32 %v1274, %v1473
      %v1538 = vmul.f32 %v1276, %v1474
      %v1539 = vmul.f32 %v1278, %v1475
      %v1540 = vmul.f32 %v1280, %v1476
      %v1541 = vmul.f32 %v1282, %v1477
      %v1542 = vmul.f32 %v1284, %v1478
      %v1543 = vmul.f32 %v1286, %v1479
      %v1544 = vmul.f32 %v1288, %v1480
      %v1545 = vpack.c.bf16 %v1481, %v1481
      %v1546 = vpack.c.bf16 %v1482, %v1482
      %v1547 = vpack.c.bf16 %v1483, %v1483
      %v1548 = vpack.c.bf16 %v1484, %v1484
      %v1549 = vpack.c.bf16 %v1485, %v1485
      %v1550 = vpack.c.bf16 %v1486, %v1486
      %v1551 = vpack.c.bf16 %v1487, %v1487
      %v1552 = vpack.c.bf16 %v1488, %v1488
      %v1553 = vpack.c.bf16 %v1489, %v1489
      %v1554 = vpack.c.bf16 %v1490, %v1490
      %v1555 = vpack.c.bf16 %v1491, %v1491
      %v1556 = vpack.c.bf16 %v1492, %v1492
      %v1557 = vpack.c.bf16 %v1493, %v1493
      %v1558 = vpack.c.bf16 %v1494, %v1494
      %v1559 = vpack.c.bf16 %v1495, %v1495
      %v1560 = vpack.c.bf16 %v1496, %v1496
      %v1561 = vpack.c.bf16 %v1497, %v1497
      %v1562 = vpack.c.bf16 %v1498, %v1498
      %v1563 = vpack.c.bf16 %v1499, %v1499
      %v1564 = vpack.c.bf16 %v1500, %v1500
      %v1565 = vpack.c.bf16 %v1501, %v1501
      %v1566 = vpack.c.bf16 %v1502, %v1502
      %v1567 = vpack.c.bf16 %v1503, %v1503
      %v1568 = vpack.c.bf16 %v1504, %v1504
      %v1569 = vpack.c.bf16 %v1505, %v1505
      %v1570 = vpack.c.bf16 %v1506, %v1506
      %v1571 = vpack.c.bf16 %v1507, %v1507
      %v1572 = vpack.c.bf16 %v1508, %v1508
      %v1573 = vpack.c.bf16 %v1509, %v1509
      %v1574 = vpack.c.bf16 %v1510, %v1510
      %v1575 = vpack.c.bf16 %v1511, %v1511
      %v1576 = vpack.c.bf16 %v1512, %v1512
      %v1577 = vpack.c.bf16 %v1513, %v1513
      %v1578 = vpack.c.bf16 %v1514, %v1514
      %v1579 = vpack.c.bf16 %v1515, %v1515
      %v1580 = vpack.c.bf16 %v1516, %v1516
      %v1581 = vpack.c.bf16 %v1517, %v1517
      %v1582 = vpack.c.bf16 %v1518, %v1518
      %v1583 = vpack.c.bf16 %v1519, %v1519
      %v1584 = vpack.c.bf16 %v1520, %v1520
      %v1585 = vpack.c.bf16 %v1521, %v1521
      %v1586 = vpack.c.bf16 %v1522, %v1522
      %v1587 = vpack.c.bf16 %v1523, %v1523
      %v1588 = vpack.c.bf16 %v1524, %v1524
      %v1589 = vpack.c.bf16 %v1525, %v1525
      %v1590 = vpack.c.bf16 %v1526, %v1526
      %v1591 = vpack.c.bf16 %v1527, %v1527
      %v1592 = vpack.c.bf16 %v1528, %v1528
      %v1593 = vpack.c.bf16 %v1529, %v1529
      %v1594 = vpack.c.bf16 %v1530, %v1530
      %v1595 = vpack.c.bf16 %v1531, %v1531
      %v1596 = vpack.c.bf16 %v1532, %v1532
      %v1597 = vpack.c.bf16 %v1533, %v1533
      %v1598 = vpack.c.bf16 %v1534, %v1534
      %v1599 = vpack.c.bf16 %v1535, %v1535
      %v1600 = vpack.c.bf16 %v1536, %v1536
      %v1601 = vpack.c.bf16 %v1537, %v1537
      %v1602 = vpack.c.bf16 %v1538, %v1538
      %v1603 = vpack.c.bf16 %v1539, %v1539
      %v1604 = vpack.c.bf16 %v1540, %v1540
      %v1605 = vpack.c.bf16 %v1541, %v1541
      %v1606 = vpack.c.bf16 %v1542, %v1542
      %v1607 = vpack.c.bf16 %v1543, %v1543
      %v1608 = vpack.c.bf16 %v1544, %v1544
      %v1625 = vunpack.c.l.b16 %v1545
      %v1626 = vunpack.c.l.b16 %v1546
      %v1627 = vunpack.c.l.b16 %v1547
      %v1628 = vunpack.c.l.b16 %v1548
      %v1629 = vunpack.c.l.b16 %v1549
      %v1630 = vunpack.c.l.b16 %v1550
      %v1631 = vunpack.c.l.b16 %v1551
      %v1632 = vunpack.c.l.b16 %v1552
      %v1633 = vunpack.c.l.b16 %v1553
      %v1634 = vunpack.c.l.b16 %v1554
      %v1635 = vunpack.c.l.b16 %v1555
      %v1636 = vunpack.c.l.b16 %v1556
      %v1637 = vunpack.c.l.b16 %v1557
      %v1638 = vunpack.c.l.b16 %v1558
      %v1639 = vunpack.c.l.b16 %v1559
      %v1640 = vunpack.c.l.b16 %v1560
      %v1641 = vpack.c.b16 %v1626, %v1625
      %v1642 = vpack.c.b16 %v1628, %v1627
      %v1643 = vpack.c.b16 %v1630, %v1629
      %v1644 = vpack.c.b16 %v1632, %v1631
      %v1645 = vpack.c.b16 %v1634, %v1633
      %v1646 = vpack.c.b16 %v1636, %v1635
      %v1647 = vpack.c.b16 %v1638, %v1637
      %v1648 = vpack.c.b16 %v1640, %v1639
      %1657 = vmatpush.bf16.xpose.msra.mxu0 %v1648
      %1658 = vmatpush.bf16.xpose.msra.mxu0 %v1647
      %1659 = vmatpush.bf16.xpose.msra.mxu0 %v1646
      %1660 = vmatpush.bf16.xpose.msra.mxu0 %v1645
      %1661 = vmatpush.bf16.xpose.msra.mxu0 %v1644
      %1662 = vmatpush.bf16.xpose.msra.mxu0 %v1643
      %1663 = vmatpush.bf16.xpose.msra.mxu0 %v1642
      %1664 = vmatpush.bf16.xpose.msra.mxu0 %v1641
      %1665 = vmatmul.bf16.gmra.mxu0 %v526
      %v1666 = vpop.f32.mrf.mxu0
      %v1667 = vadd.f32 0.0, %v1666
      %v1668 = vpop.f32.mrf.mxu0
      %1669 = vdwg.mxu0
      %v1686 = vunpack.c.l.b16 %v1561
      %v1687 = vunpack.c.l.b16 %v1562
      %v1688 = vunpack.c.l.b16 %v1563
      %v1689 = vunpack.c.l.b16 %v1564
      %v1690 = vunpack.c.l.b16 %v1565
      %v1691 = vunpack.c.l.b16 %v1566
      %v1692 = vunpack.c.l.b16 %v1567
      %v1693 = vunpack.c.l.b16 %v1568
      %v1694 = vunpack.c.l.b16 %v1569
      %v1695 = vunpack.c.l.b16 %v1570
      %v1696 = vunpack.c.l.b16 %v1571
      %v1697 = vunpack.c.l.b16 %v1572
      %v1698 = vunpack.c.l.b16 %v1573
      %v1699 = vunpack.c.l.b16 %v1574
      %v1700 = vunpack.c.l.b16 %v1575
      %v1701 = vunpack.c.l.b16 %v1576
      %v1702 = vpack.c.b16 %v1687, %v1686
      %v1703 = vpack.c.b16 %v1689, %v1688
      %v1704 = vpack.c.b16 %v1691, %v1690
      %v1705 = vpack.c.b16 %v1693, %v1692
      %v1706 = vpack.c.b16 %v1695, %v1694
      %v1707 = vpack.c.b16 %v1697, %v1696
      %v1708 = vpack.c.b16 %v1699, %v1698
      %v1709 = vpack.c.b16 %v1701, %v1700
      %1718 = vmatpush.bf16.xpose.msra.mxu0 %v1709
      %1719 = vmatpush.bf16.xpose.msra.mxu0 %v1708
      %1720 = vmatpush.bf16.xpose.msra.mxu0 %v1707
      %1721 = vmatpush.bf16.xpose.msra.mxu0 %v1706
      %1722 = vmatpush.bf16.xpose.msra.mxu0 %v1705
      %1723 = vmatpush.bf16.xpose.msra.mxu0 %v1704
      %1724 = vmatpush.bf16.xpose.msra.mxu0 %v1703
      %1725 = vmatpush.bf16.xpose.msra.mxu0 %v1702
      %1726 = vmatmul.bf16.gmra.mxu0 %v527
      %v1727 = vpop.f32.mrf.mxu0
      %v1728 = vadd.f32 0.0, %v1727
      %v1729 = vpop.f32.mrf.mxu0
      %1730 = vdwg.mxu0
      %v1747 = vunpack.c.l.b16 %v1577
      %v1748 = vunpack.c.l.b16 %v1578
      %v1749 = vunpack.c.l.b16 %v1579
      %v1750 = vunpack.c.l.b16 %v1580
      %v1751 = vunpack.c.l.b16 %v1581
      %v1752 = vunpack.c.l.b16 %v1582
      %v1753 = vunpack.c.l.b16 %v1583
      %v1754 = vunpack.c.l.b16 %v1584
      %v1755 = vunpack.c.l.b16 %v1585
      %v1756 = vunpack.c.l.b16 %v1586
      %v1757 = vunpack.c.l.b16 %v1587
      %v1758 = vunpack.c.l.b16 %v1588
      %v1759 = vunpack.c.l.b16 %v1589
      %v1760 = vunpack.c.l.b16 %v1590
      %v1761 = vunpack.c.l.b16 %v1591
      %v1762 = vunpack.c.l.b16 %v1592
      %v1763 = vpack.c.b16 %v1748, %v1747
      %v1764 = vpack.c.b16 %v1750, %v1749
      %v1765 = vpack.c.b16 %v1752, %v1751
      %v1766 = vpack.c.b16 %v1754, %v1753
      %v1767 = vpack.c.b16 %v1756, %v1755
      %v1768 = vpack.c.b16 %v1758, %v1757
      %v1769 = vpack.c.b16 %v1760, %v1759
      %v1770 = vpack.c.b16 %v1762, %v1761
      %1779 = vmatpush.bf16.xpose.msra.mxu0 %v1770
      %1780 = vmatpush.bf16.xpose.msra.mxu0 %v1769
      %1781 = vmatpush.bf16.xpose.msra.mxu0 %v1768
      %1782 = vmatpush.bf16.xpose.msra.mxu0 %v1767
      %1783 = vmatpush.bf16.xpose.msra.mxu0 %v1766
      %1784 = vmatpush.bf16.xpose.msra.mxu0 %v1765
      %1785 = vmatpush.bf16.xpose.msra.mxu0 %v1764
      %1786 = vmatpush.bf16.xpose.msra.mxu0 %v1763
      %1787 = vmatmul.bf16.gmra.mxu0 %v528
      %v1788 = vpop.f32.mrf.mxu0
      %v1789 = vadd.f32 0.0, %v1788
      %v1790 = vpop.f32.mrf.mxu0
      %1791 = vdwg.mxu0
      %v1808 = vunpack.c.l.b16 %v1593
      %v1809 = vunpack.c.l.b16 %v1594
      %v1810 = vunpack.c.l.b16 %v1595
      %v1811 = vunpack.c.l.b16 %v1596
      %v1812 = vunpack.c.l.b16 %v1597
      %v1813 = vunpack.c.l.b16 %v1598
      %v1814 = vunpack.c.l.b16 %v1599
      %v1815 = vunpack.c.l.b16 %v1600
      %v1816 = vunpack.c.l.b16 %v1601
      %v1817 = vunpack.c.l.b16 %v1602
      %v1818 = vunpack.c.l.b16 %v1603
      %v1819 = vunpack.c.l.b16 %v1604
      %v1820 = vunpack.c.l.b16 %v1605
      %v1821 = vunpack.c.l.b16 %v1606
      %v1822 = vunpack.c.l.b16 %v1607
      %v1823 = vunpack.c.l.b16 %v1608
      %v1824 = vpack.c.b16 %v1809, %v1808
      %v1825 = vpack.c.b16 %v1811, %v1810
      %v1826 = vpack.c.b16 %v1813, %v1812
      %v1827 = vpack.c.b16 %v1815, %v1814
      %v1828 = vpack.c.b16 %v1817, %v1816
      %v1829 = vpack.c.b16 %v1819, %v1818
      %v1830 = vpack.c.b16 %v1821, %v1820
      %v1831 = vpack.c.b16 %v1823, %v1822
      %1840 = vmatpush.bf16.xpose.msra.mxu0 %v1831
      %1841 = vmatpush.bf16.xpose.msra.mxu0 %v1830
      %1842 = vmatpush.bf16.xpose.msra.mxu0 %v1829
      %1843 = vmatpush.bf16.xpose.msra.mxu0 %v1828
      %1844 = vmatpush.bf16.xpose.msra.mxu0 %v1827
      %1845 = vmatpush.bf16.xpose.msra.mxu0 %v1826
      %1846 = vmatpush.bf16.xpose.msra.mxu0 %v1825
      %1847 = vmatpush.bf16.xpose.msra.mxu0 %v1824
      %1848 = vmatmul.bf16.gmra.mxu0 %v529
      %v1849 = vpop.f32.mrf.mxu0
      %v1850 = vadd.f32 0.0, %v1849
      %v1851 = vpop.f32.mrf.mxu0
      %1852 = vdwg.mxu0
      %v1853 = vadd.f32 %v1667, %v428
      %v1854 = vadd.f32 %v1728, %v430
      %v1855 = vadd.f32 %v1789, %v433
      %v1856 = vadd.f32 %v1850, %v435
      %v1857 = vadd.f32 %v1853, %v1854
      %v1858 = vadd.f32 %v1857, %v1855
      %v1859 = vadd.f32 %v1858, %v1856
      %v1860 = vrot.slane %v1859, 4
      %v1861 = vadd.f32 %v1859, %v1860
      %v1862 = vrot.slane %v1861, 2
      %v1863 = vadd.f32 %v1861, %v1862
      %v1864 = vrot.slane %v1863, 1
      %v1865 = vadd.f32 %v1863, %v1864
      %v1866 = vrcp.pop 32.0
      %v1867 = vmul.f32 32.0, %v1866
      %v1868 = vsub.f32 1.0, %v1867
      %v1869 = vmul.f32 %v1866, %v1868
      %v1870 = vadd.f32 %v1866, %v1869
      %vm1871 = vweird.f32 %v1866
      %v1872 = vsel %vm1871, %v1866, %v1870
      %v1873 = vmul.f32 %v1865, %v1872
      %v1874 = vsub.f32 %v1853, %v1873
      %v1875 = vsub.f32 %v1854, %v1873
      %v1876 = vsub.f32 %v1855, %v1873
      %v1877 = vsub.f32 %v1856, %v1873
      %v1878 = vmul.f32 %v1874, %v1874
      %v1879 = vmul.f32 %v1875, %v1875
      %v1880 = vmul.f32 %v1876, %v1876
      %v1881 = vmul.f32 %v1877, %v1877
      %v1882 = vadd.f32 %v1878, %v1879
      %v1883 = vadd.f32 %v1882, %v1880
      %v1884 = vadd.f32 %v1883, %v1881
      %v1885 = vrot.slane %v1884, 4
      %v1886 = vadd.f32 %v1884, %v1885
      %v1887 = vrot.slane %v1886, 2
      %v1888 = vadd.f32 %v1886, %v1887
      %v1889 = vrot.slane %v1888, 1
      %v1890 = vadd.f32 %v1888, %v1889
      %v1891 = vmul.f32 %v1890, %v1872
      %v1892 = vadd.f32 %v1891, 1e-06
      %v1893 = vrsqrt.pop %v1892
      %v1894 = vmul.f32 %v1893, %v1892
      %v1895 = vmul.f32 %v1894, %v1893
      %v1896 = vmul.f32 0.5, %v1895
      %v1897 = vsub.f32 1.5, %v1896
      %v1898 = vmul.f32 %v1893, %v1897
      %vm1899 = vweird.f32 %v1892
      %vm1900 = vweird.f32 %v1893
      %vm1901 = vmor %vm1899, %vm1900
      %v1902 = vsel %vm1901, %v1893, %v1898
      %v1903 = vmul.f32 %v1874, %v1902
      %v1904 = vmul.f32 %v1875, %v1902
      %v1905 = vmul.f32 %v1876, %v1902
      %v1906 = vmul.f32 %v1877, %v1902
      %v1907 = vld [vmem:[%s353] sm:$0xf]
      %v1908 = vld [vmem:[%s353 + $0x4] sm:$0xf]
      %v1909 = vld [vmem:[%s353 + $0x8] sm:$0xf]
      %v1910 = vld [vmem:[%s353 + $0xc] sm:$0xf]
      %v1911 = vpack.c.bf16 %v1904, %v1903
      %v1912 = vpack.c.bf16 %v1906, %v1905
      %v1913 = vld [vmem:[%s358] sm:$0xff]
      %v1914 = vld [vmem:[%s358 + $0x8] sm:$0xff]
      %v1915 = vld [vmem:[%s358 + $0x10] sm:$0xff]
      %v1916 = vld [vmem:[%s358 + $0x18] sm:$0xff]
      %1918 = vset.pattern.permute.xlu0 0
      %1919 = vperm.xlu0 %1918, %v1913
      %v1920 = vpop.permute.xlu0 %1919
      %1923 = vset.pattern.permute.xlu0 0
      %1924 = vperm.xlu0 %1923, %v1914
      %v1925 = vpop.permute.xlu0 %1924
      %1928 = vset.pattern.permute.xlu0 0
      %1929 = vperm.xlu0 %1928, %v1915
      %v1930 = vpop.permute.xlu0 %1929
      %1933 = vset.pattern.permute.xlu0 0
      %1934 = vperm.xlu0 %1933, %v1916
      %v1935 = vpop.permute.xlu0 %1934
      %v1941 = vunpack.c.l.b16 %v1907
      %v1942 = vunpack.c.l.b16 %v1908
      %v1943 = vunpack.c.l.b16 %v1909
      %v1944 = vunpack.c.l.b16 %v1910
      %v1945 = vpack.c.b16 %v1942, %v1941
      %v1946 = vpack.c.b16 %v1944, %v1943
      %v1948 = vsel %vm411, %v1945, 0
      %v1951 = vsel %vm411, %v1946, 0
      %1953 = vmatpush.bf16.msra.mxu0 0
      %1954 = vmatpush.bf16.msra.mxu0 0
      %1955 = vmatpush.bf16.msra.mxu0 0
      %1956 = vmatpush.bf16.msra.mxu0 0
      %1957 = vmatpush.bf16.msra.mxu0 0
      %1958 = vmatpush.bf16.msra.mxu0 0
      %1959 = vmatpush.bf16.msra.mxu0 %v1912
      %1960 = vmatpush.bf16.msra.mxu0 %v1911
      %1961 = vmatmul.bf16.gmra.mxu0 %v1948
      %v1962 = vpop.f32.mrf.mxu0
      %v1963 = vadd.f32 %v1920, %v1962
      %v1964 = vpop.f32.mrf.mxu0
      %v1965 = vadd.f32 %v1925, %v1964
      %1966 = vmatmul.bf16.gmra.mxu0 %v1951
      %v1967 = vpop.f32.mrf.mxu0
      %v1968 = vadd.f32 %v1930, %v1967
      %v1969 = vpop.f32.mrf.mxu0
      %v1970 = vadd.f32 %v1935, %v1969
      %1971 = vdwg.mxu0
      %v1972 = vpack.c.bf16 %v1963, %v1963
      %v1973 = vpack.c.bf16 %v1965, %v1965
      %v1974 = vpack.c.bf16 %v1968, %v1968
      %v1975 = vpack.c.bf16 %v1970, %v1970
      %1976 = vst [vmem:[#allocation2] sm:$0xf] %v1972
      %1977 = vst [vmem:[#allocation2 + $0x4] sm:$0xf] %v1973
      %1978 = vst [vmem:[#allocation2 + $0x8] sm:$0xf] %v1974
      %1979 = vst [vmem:[#allocation2 + $0xc] sm:$0xf] %v1975
      %p1980 = scmp.eq.s32.totalorder %s22, 1
      // Predicated region
      $region49: #{component_attention_forward.1} parent=43 // pred_check
        %p1981 = pneg %p1980
      $region50: #{component_attention_forward.1} parent=43 // pred_check_branch
        %1983 = sbr.rel (%p1981) target = $region52
      $region51: #{component_attention_forward.1} parent=43 // pred_region
        %1984 = vst [vmem:[%s363] sm:$0xff] %v1963
        %1985 = vst [vmem:[%s363 + $0x8] sm:$0xff] %v1965
        %1986 = vst [vmem:[%s363 + $0x10] sm:$0xff] %v1968
        %1987 = vst [vmem:[%s363 + $0x18] sm:$0xff] %v1970
      $region52: #{component_attention_forward.1} parent=43 // pred_fallthru
        _
      %p1988 = scmp.lt.s32.totalorder %s21, 1
      %s1989 = scalar_select %p1988, %s21, 1
      %s1990 = smul.addr %s1989, 4
      %s1991 = smul.addr %s1990, 8
      %s1992 = scalar_lea.vmem %s6, %s1991
      // Predicated region
      $region53: #{component_attention_forward.1} parent=43 // pred_check
        %p1993 = pneg %p203
      $region54: #{component_attention_forward.1} parent=43 // pred_check_branch
        %1995 = sbr.rel (%p1993) target = $region56
      $region55: #{component_attention_forward.1} parent=43 // pred_region
        _
      $region56: #{component_attention_forward.1} parent=43 // pred_fallthru
        _
    $region44: #{component_attention_forward.1} parent=5 // pred_fallthru
      _
    %p1996 = scmp.le.s32.totalorder 2, %s12
    // Predicated region
    $region57: #{component_attention_forward.1} parent=5 // pred_check
      %p1997 = pneg %p1996
    $region58: #{component_attention_forward.1} parent=5 // pred_check_branch
      %1999 = sbr.rel (%p1997) target = $region60
    $region59: #{component_attention_forward.1} parent=5 // pred_region
      %s2000 = ssub.s32 %s12, 2
      // Predicated region
      $region61: #{component_attention_forward.1} parent=59 // pred_check
        %p2001 = pneg %p209
      $region62: #{component_attention_forward.1} parent=59 // pred_check_branch
        %2003 = sbr.rel (%p2001) target = $region64
      $region63: #{component_attention_forward.1} parent=59 // pred_region
        %p2004 = scmp.lt.s32.totalorder %s23, 1
        %s2005 = scalar_select %p2004, %s23, 1
        %s2006 = smul.addr %s2005, 4
        %s2007 = smul.addr %s2006, 8
        %s2008 = scalar_lea.vmem %s6, %s2007
      $region64: #{component_attention_forward.1} parent=59 // pred_fallthru
        _
    $region60: #{component_attention_forward.1} parent=5 // pred_fallthru
      _
  $region6: #{component_attention_forward.1} parent=0 // loop_footer
    %s16 = sadd.s32 1, %s12
  $region7: #{component_attention_forward.1} parent=0 // loop_footer_branch
    %11 = sbr.rel target = $region3
  $region8: #{component_attention_forward.1} parent=0 // loop_exit
    _

</llo_original>
